<compile_context>
chip_gen: v7x
topology: tpu7x:2x2x1
jax: 0.10.0
libtpu: 0.0.40
codegen_flags: <defaults>
</compile_context>

<pallas_src>
import functools

import jax
import jax.numpy as jnp
from jax import lax
from jax.experimental import pallas as pl
from jax.experimental.pallas import tpu as pltpu

L = 64   # feature_extractor output dim
D = 64   # attention hidden dim
K = 1    # attention "heads"

NEG_INF = -1e30  # plain Python float: kernels must not capture concrete jnp arrays


def _gated_attention_kernel(
    # inputs
    x_ref,
    w1_ref, b1_ref,
    w2_ref, b2_ref,
    w3_ref, b3_ref,
    wvu_ref, bvu_ref,
    ww_ref, bw_ref,
    wc_ref, bc_ref,
    # outputs
    yprob_ref, a_ref, lse_ref,
    # scratch (persists across grid steps)
    m_sc, l_sc, acc_sc,
    *, n_valid: int, tile_n: int,
):
    i = pl.program_id(0)

    @pl.when(i == 0)
    def _init():
        m_sc[...] = jnp.full(m_sc.shape, NEG_INF, m_sc.dtype)
        l_sc[...] = jnp.zeros_like(l_sc)
        acc_sc[...] = jnp.zeros_like(acc_sc)

    # ---- feature extractor: 3x (Linear -> ReLU); Pdropout == identity (eval) ----
    # bf16 operands on the MXU, f32 accumulation.
    x = x_ref[...]                                                        # (tile_n, F) bf16
    h = jnp.dot(x, w1_ref[...], preferred_element_type=jnp.float32) + b1_ref[...]
    h = jnp.maximum(h, 0.0)                                               # (tile_n, 256)
    h = jnp.dot(h.astype(jnp.bfloat16), w2_ref[...],
                preferred_element_type=jnp.float32) + b2_ref[...]
    h = jnp.maximum(h, 0.0)                                               # (tile_n, 128)
    h = jnp.dot(h.astype(jnp.bfloat16), w3_ref[...],
                preferred_element_type=jnp.float32) + b3_ref[...]
    h = jnp.maximum(h, 0.0)                                               # (tile_n, L) f32

    # ---- fused gate projection: one lane-dense (L, 2D) = (64, 128) matmul ----
    g = jnp.dot(h.astype(jnp.bfloat16), wvu_ref[...],
                preferred_element_type=jnp.float32) + bvu_ref[...]        # (tile_n, 2D)
    a_v = jnp.tanh(g[:, :D])
    a_u = jax.nn.sigmoid(g[:, D:])
    gate = a_v * a_u                                                      # (tile_n, D)

    # ---- attention score per instance: VPU multiply + lane reduction (K = 1) ----
    scores = jnp.sum(gate * ww_ref[...], axis=-1, keepdims=True) + bw_ref[...]  # (tile_n, 1)

    # mask rows beyond the true bag size (ragged tail tile)
    row = i * tile_n + lax.broadcasted_iota(jnp.int32, (tile_n, 1), 0)
    scores = jnp.where(row < n_valid, scores, NEG_INF)

    # lane-dense store of this tile's raw scores (one small XLU transpose per step);
    # softmax normalization of A happens in the wrapper via the exported logsumexp.
    a_ref[...] = jnp.transpose(scores).astype(a_ref.dtype)               # (1, tile_n)

    # ---- online softmax over the instance axis + weighted-h accumulation ----
    m_prev = m_sc[...]                                                    # (1, 1)
    m_new = jnp.maximum(m_prev, jnp.max(scores, axis=0, keepdims=True))   # (1, 1)
    alpha = jnp.exp(m_prev - m_new)                                       # (1, 1)
    p = jnp.exp(scores - m_new)                                           # (tile_n, 1)
    l_sc[...] = alpha * l_sc[...] + jnp.sum(p, axis=0, keepdims=True)
    acc_sc[...] = alpha * acc_sc[...] + jnp.sum(p * h, axis=0, keepdims=True)  # (1, L)
    m_sc[...] = m_new

    @pl.when(i == pl.num_programs(0) - 1)
    def _finalize():
        l = l_sc[...]                                                     # (1, 1)
        m_pool = acc_sc[...] / l                                          # (1, L) == A @ H (exact recip; tiny path)
        y = jnp.dot(m_pool, wc_ref[...],
                    preferred_element_type=jnp.float32) + bc_ref[...]     # (1, num_class)
        yprob_ref[...] = y.astype(yprob_ref.dtype)
        lse_ref[...] = (m_sc[...] + jnp.log(l)).astype(lse_ref.dtype)


def _round_up(a, b):
    return ((a + b - 1) // b) * b


def pdrop_gated_attention(x, params, num_class, *, tile_n=512, interpret=False):
    n, f = x.shape
    # keep the tile lane-dense (multiple of 128) but don't over-pad tiny bags
    tile_n = max(128, min(tile_n, _round_up(n, 128)))
    num_tiles = pl.cdiv(n, tile_n)
    n_pad = num_tiles * tile_n

    # bf16 MXU path for the instance stream; pad only the ragged tail tile.
    x_in = x.astype(jnp.bfloat16)
    if n_pad != n:
        x_in = jnp.pad(x_in, ((0, n_pad - n), (0, 0)))

    # fuse V / U gate projections into one lane-dense weight / bias
    wvu = jnp.concatenate([params["wv"], params["wu"]], axis=1).astype(jnp.bfloat16)  # (L, 2D)
    bvu = jnp.concatenate([params["bv"], params["bu"]], axis=1)                        # (1, 2D) f32
    ww_row = params["ww"].reshape(1, D)                                                # (1, D) f32 (VPU)

    w1 = params["w1"].astype(jnp.bfloat16)
    w2 = params["w2"].astype(jnp.bfloat16)
    w3 = params["w3"].astype(jnp.bfloat16)

    args = (
        x_in,
        w1, params["b1"],
        w2, params["b2"],
        w3, params["b3"],
        wvu, bvu,
        ww_row, params["bw"],
        params["wc"], params["bc"],
    )

    def const(shape):
        # weights/biases: same block every grid step -> stay resident in VMEM
        return pl.BlockSpec(shape, lambda i: (0, 0))

    in_specs = [
        pl.BlockSpec((tile_n, f), lambda i: (i, 0)),   # x tiled over instances
        const((f, 256)), const((1, 256)),
        const((256, 128)), const((1, 128)),
        const((128, L)), const((1, L)),
        const((L, 2 * D)), const((1, 2 * D)),
        const((1, D)), const((1, 1)),
        const((L * K, num_class)), const((1, num_class)),
    ]
    out_specs = [
        pl.BlockSpec((1, num_class), lambda i: (0, 0)),        # Y_prob (resident, finalize)
        pl.BlockSpec((None, 1, tile_n), lambda i: (i, 0, 0)),  # raw scores, lane-dense rows
        pl.BlockSpec((1, 1), lambda i: (0, 0)),                # softmax logsumexp (finalize)
    ]
    out_shape = (
        jax.ShapeDtypeStruct((1, num_class), jnp.float32),
        jax.ShapeDtypeStruct((num_tiles, 1, tile_n), jnp.float32),
        jax.ShapeDtypeStruct((1, 1), jnp.float32),
    )

    flops = 2 * n_pad * (f * 256 + 256 * 128 + 128 * L + L * 2 * D + 2 * D + L) \
        + 2 * L * num_class
    transcendentals = n_pad * (2 * D + 1)
    bytes_accessed = 2 * n_pad * f \
        + 2 * (f * 256 + 256 * 128 + 128 * L + L * 2 * D) \
        + 4 * (256 + 128 + L + 2 * D + D + 1 + L * num_class + num_class) \
        + 4 * (n_pad + num_class + 1)

    kernel = functools.partial(_gated_attention_kernel, n_valid=n, tile_n=tile_n)

    y_prob, a_rows, lse = pl.pallas_call(
        kernel,
        out_shape=out_shape,
        grid_spec=pltpu.PrefetchScalarGridSpec(
            num_scalar_prefetch=0,
            grid=(num_tiles,),
            in_specs=in_specs,
            out_specs=out_specs,
            scratch_shapes=[
                pltpu.VMEM((1, 1), jnp.float32),   # running softmax max
                pltpu.VMEM((1, 1), jnp.float32),   # running softmax sum
                pltpu.VMEM((1, L), jnp.float32),   # running weighted-h accumulator
            ],
        ),
        compiler_params=pltpu.CompilerParams(
            # Single bag: the instance axis is a softmax/pooling reduction.
            # TODO(synk): for multi-bag MIL on v7x add a leading "parallel" bag axis
            # (or vmap over bags) so both TensorCores are used.
            dimension_semantics=("arbitrary",),
            vmem_limit_bytes=32 * 1024 * 1024,
        ),
        cost_estimate=pl.CostEstimate(
            flops=flops, transcendentals=transcendentals,
            bytes_accessed=bytes_accessed),
        interpret=interpret,
    )(*args)

    # Normalize attention in the wrapper: softmax(s) = exp(s - logsumexp(s)).
    a = jnp.exp(a_rows.reshape(1, n_pad)[:, :n] - lse)   # (1, N)
    return y_prob, a


def init_params(key, in_features, num_class):
    """Deterministic parameter init. Weights stored (in, out); biases (1, out)."""
    dims = [
        ("w1", (in_features, 256)), ("b1", (1, 256)),
        ("w2", (256, 128)),         ("b2", (1, 128)),
        ("w3", (128, L)),           ("b3", (1, L)),
        ("wv", (L, D)),             ("bv", (1, D)),
        ("wu", (L, D)),             ("bu", (1, D)),
        ("ww", (D, K)),             ("bw", (1, K)),
        ("wc", (L * K, num_class)), ("bc", (1, num_class)),
    ]
    keys = jax.random.split(key, len(dims))
    params = {}
    for (name, shape), k in zip(dims, keys):
        params[name] = (0.05 * jax.random.normal(k, shape)).astype(jnp.float32)
    return params


def _reference(x, params):
    """Pure-JAX forward matching the PyTorch module (dropout = identity)."""
    h = jax.nn.relu(x @ params["w1"] + params["b1"])
    h = jax.nn.relu(h @ params["w2"] + params["b2"])
    h = jax.nn.relu(h @ params["w3"] + params["b3"])
    a_v = jnp.tanh(h @ params["wv"] + params["bv"])
    a_u = jax.nn.sigmoid(h @ params["wu"] + params["bu"])
    a = (a_v * a_u) @ params["ww"] + params["bw"]   # (N, 1)
    a = jax.nn.softmax(jnp.transpose(a), axis=1)    # (1, N)
    m = a @ h                                       # (1, L)
    y = m @ params["wc"] + params["bc"]
    return y, a


if __name__ == "__main__":
    key = jax.random.PRNGKey(0)
    kx, kp = jax.random.split(key)

    N = 8              # instances per bag
    in_features = 32
    num_class = 2

    x = jax.random.normal(kx, (N, in_features), dtype=jnp.float32)
    params = init_params(kp, in_features, num_class)

    y_prob, attn = pdrop_gated_attention(x, params, num_class)
    jax.block_until_ready((y_prob, attn))

    assert y_prob.shape == (1, num_class)
    assert attn.shape == (1, N)

    y_ref, a_ref = _reference(x, params)
    assert bool(jnp.allclose(y_prob, y_ref, rtol=5e-2, atol=2e-3)), "Y_prob mismatch"
    assert bool(jnp.allclose(attn, a_ref, rtol=5e-2, atol=2e-3)), "attention mismatch"

    print("KERNEL_OK")
</pallas_src>

<mosaic_0001>
module attributes {stable_mosaic.version = 11 : i64} {
  func.func @_gated_attention_kernel(%arg0: i32, %arg1: memref<128x32xbf16, #tpu.memory_space<vmem>>, %arg2: memref<32x256xbf16, #tpu.memory_space<vmem>>, %arg3: memref<1x256xf32, #tpu.memory_space<vmem>>, %arg4: memref<256x128xbf16, #tpu.memory_space<vmem>>, %arg5: memref<1x128xf32, #tpu.memory_space<vmem>>, %arg6: memref<128x64xbf16, #tpu.memory_space<vmem>>, %arg7: memref<1x64xf32, #tpu.memory_space<vmem>>, %arg8: memref<64x128xbf16, #tpu.memory_space<vmem>>, %arg9: memref<1x128xf32, #tpu.memory_space<vmem>>, %arg10: memref<1x64xf32, #tpu.memory_space<vmem>>, %arg11: memref<1x1xf32, #tpu.memory_space<vmem>>, %arg12: memref<64x2xf32, #tpu.memory_space<vmem>>, %arg13: memref<1x2xf32, #tpu.memory_space<vmem>>, %arg14: memref<1x2xf32, #tpu.memory_space<vmem>>, %arg15: memref<1x1x128xf32, #tpu.memory_space<vmem>>, %arg16: memref<1x1xf32, #tpu.memory_space<vmem>>, %arg17: memref<1x1xf32, #tpu.memory_space<vmem>>, %arg18: memref<1x1xf32, #tpu.memory_space<vmem>>, %arg19: memref<1x64xf32, #tpu.memory_space<vmem>>) attributes {dimension_semantics = [#tpu.dimension_semantics<arbitrary>], iteration_bounds = array<i64: 1>, scalar_prefetch = 0 : i64, scratch_operands = 3 : i64, tpu.core_type = #tpu.core_type<tc>, window_params = [{transform_indices = @transform_0, window_bounds = array<i64: 128, 32>}, {pipeline_mode = #tpu.pipeline_mode<synchronous>, transform_indices = @transform_1, window_bounds = array<i64: 32, 256>}, {pipeline_mode = #tpu.pipeline_mode<synchronous>, transform_indices = @transform_2, window_bounds = array<i64: 1, 256>}, {pipeline_mode = #tpu.pipeline_mode<synchronous>, transform_indices = @transform_3, window_bounds = array<i64: 256, 128>}, {pipeline_mode = #tpu.pipeline_mode<synchronous>, transform_indices = @transform_4, window_bounds = array<i64: 1, 128>}, {pipeline_mode = #tpu.pipeline_mode<synchronous>, transform_indices = @transform_5, window_bounds = array<i64: 128, 64>}, {pipeline_mode = #tpu.pipeline_mode<synchronous>, transform_indices = @transform_6, window_bounds = array<i64: 1, 64>}, {pipeline_mode = #tpu.pipeline_mode<synchronous>, transform_indices = @transform_7, window_bounds = array<i64: 64, 128>}, {pipeline_mode = #tpu.pipeline_mode<synchronous>, transform_indices = @transform_8, window_bounds = array<i64: 1, 128>}, {pipeline_mode = #tpu.pipeline_mode<synchronous>, transform_indices = @transform_9, window_bounds = array<i64: 1, 64>}, {pipeline_mode = #tpu.pipeline_mode<synchronous>, transform_indices = @transform_10, window_bounds = array<i64: 1, 1>}, {pipeline_mode = #tpu.pipeline_mode<synchronous>, transform_indices = @transform_11, window_bounds = array<i64: 64, 2>}, {pipeline_mode = #tpu.pipeline_mode<synchronous>, transform_indices = @transform_12, window_bounds = array<i64: 1, 2>}, {pipeline_mode = #tpu.pipeline_mode<synchronous>, transform_indices = @transform_13, window_bounds = array<i64: 1, 2>}, {transform_indices = @transform_14, window_bounds = array<i64: 1, 1, 128>}, {pipeline_mode = #tpu.pipeline_mode<synchronous>, transform_indices = @transform_15, window_bounds = array<i64: 1, 1>}]} {
    %c0_i32 = arith.constant 0 : i32
    %0 = arith.cmpi eq, %arg0, %c0_i32 : i32
    %1 = arith.extui %0 : i1 to i32
    %c0_i32_0 = arith.constant 0 : i32
    %2 = arith.cmpi ne, %1, %c0_i32_0 : i32
    scf.if %2 {
      %cst_51 = arith.constant -1.000000e+30 : f32
      %90 = vector.broadcast %cst_51 : f32 to vector<1x1xf32>
      %c0_52 = arith.constant 0 : index
      %c0_53 = arith.constant 0 : index
      %91 = vector.load %arg17[%c0_52, %c0_53] : memref<1x1xf32, #tpu.memory_space<vmem>>, vector<1x1xf32>
      tpu.vector_store %arg17[%c0_52, %c0_53], %90 {strides = array<i32>} : memref<1x1xf32, #tpu.memory_space<vmem>>, vector<1x1xf32>,
      %cst_54 = arith.constant 0.000000e+00 : f32
      %92 = vector.broadcast %cst_54 : f32 to vector<1x1xf32>
      %c0_55 = arith.constant 0 : index
      %c0_56 = arith.constant 0 : index
      %93 = vector.load %arg18[%c0_55, %c0_56] : memref<1x1xf32, #tpu.memory_space<vmem>>, vector<1x1xf32>
      tpu.vector_store %arg18[%c0_55, %c0_56], %92 {strides = array<i32>} : memref<1x1xf32, #tpu.memory_space<vmem>>, vector<1x1xf32>,
      %cst_57 = arith.constant 0.000000e+00 : f32
      %94 = vector.broadcast %cst_57 : f32 to vector<1x64xf32>
      %c0_58 = arith.constant 0 : index
      %c0_59 = arith.constant 0 : index
      %95 = vector.load %arg19[%c0_58, %c0_59] : memref<1x64xf32, #tpu.memory_space<vmem>>, vector<1x64xf32>
      tpu.vector_store %arg19[%c0_58, %c0_59], %94 {strides = array<i32>} : memref<1x64xf32, #tpu.memory_space<vmem>>, vector<1x64xf32>,
    } else {
    }
    %c0 = arith.constant 0 : index
    %c0_1 = arith.constant 0 : index
    %3 = vector.load %arg1[%c0, %c0_1] : memref<128x32xbf16, #tpu.memory_space<vmem>>, vector<128x32xbf16>
    %c0_2 = arith.constant 0 : index
    %c0_3 = arith.constant 0 : index
    %4 = vector.load %arg2[%c0_2, %c0_3] : memref<32x256xbf16, #tpu.memory_space<vmem>>, vector<32x256xbf16>
    %cst = arith.constant dense<0.000000e+00> : vector<128x256xf32>
    %5 = tpu.matmul %3, %4, %cst {dimension_numbers = #tpu.dot_dimension_numbers<[1], [0], [0], [1], [0, 0, 1, 1], [], []>} : vector<128x32xbf16>, vector<32x256xbf16>, vector<128x256xf32> -> vector<128x256xf32>
    %c0_4 = arith.constant 0 : index
    %c0_5 = arith.constant 0 : index
    %6 = vector.load %arg3[%c0_4, %c0_5] : memref<1x256xf32, #tpu.memory_space<vmem>>, vector<1x256xf32>
    %7 = vector.broadcast %6 : vector<1x256xf32> to vector<128x256xf32>
    %8 = arith.addf %5, %7 : vector<128x256xf32>
    %cst_6 = arith.constant 0.000000e+00 : f32
    %9 = vector.broadcast %cst_6 : f32 to vector<128x256xf32>
    %10 = arith.maximumf %8, %9 : vector<128x256xf32>
    %11 = arith.truncf %10 : vector<128x256xf32> to vector<128x256xbf16>
    %c0_7 = arith.constant 0 : index
    %c0_8 = arith.constant 0 : index
    %12 = vector.load %arg4[%c0_7, %c0_8] : memref<256x128xbf16, #tpu.memory_space<vmem>>, vector<256x128xbf16>
    %cst_9 = arith.constant dense<0.000000e+00> : vector<128x128xf32>
    %13 = tpu.matmul %11, %12, %cst_9 {dimension_numbers = #tpu.dot_dimension_numbers<[1], [0], [0], [1], [0, 0, 1, 1], [], []>} : vector<128x256xbf16>, vector<256x128xbf16>, vector<128x128xf32> -> vector<128x128xf32>
    %c0_10 = arith.constant 0 : index
    %c0_11 = arith.constant 0 : index
    %14 = vector.load %arg5[%c0_10, %c0_11] : memref<1x128xf32, #tpu.memory_space<vmem>>, vector<1x128xf32>
    %15 = vector.broadcast %14 : vector<1x128xf32> to vector<128x128xf32>
    %16 = arith.addf %13, %15 : vector<128x128xf32>
    %cst_12 = arith.constant 0.000000e+00 : f32
    %17 = vector.broadcast %cst_12 : f32 to vector<128x128xf32>
    %18 = arith.maximumf %16, %17 : vector<128x128xf32>
    %19 = arith.truncf %18 : vector<128x128xf32> to vector<128x128xbf16>
    %c0_13 = arith.constant 0 : index
    %c0_14 = arith.constant 0 : index
    %20 = vector.load %arg6[%c0_13, %c0_14] : memref<128x64xbf16, #tpu.memory_space<vmem>>, vector<128x64xbf16>
    %cst_15 = arith.constant dense<0.000000e+00> : vector<128x64xf32>
    %21 = tpu.matmul %19, %20, %cst_15 {dimension_numbers = #tpu.dot_dimension_numbers<[1], [0], [0], [1], [0, 0, 1, 1], [], []>} : vector<128x128xbf16>, vector<128x64xbf16>, vector<128x64xf32> -> vector<128x64xf32>
    %c0_16 = arith.constant 0 : index
    %c0_17 = arith.constant 0 : index
    %22 = vector.load %arg7[%c0_16, %c0_17] : memref<1x64xf32, #tpu.memory_space<vmem>>, vector<1x64xf32>
    %23 = vector.broadcast %22 : vector<1x64xf32> to vector<128x64xf32>
    %24 = arith.addf %21, %23 : vector<128x64xf32>
    %cst_18 = arith.constant 0.000000e+00 : f32
    %25 = vector.broadcast %cst_18 : f32 to vector<128x64xf32>
    %26 = arith.maximumf %24, %25 : vector<128x64xf32>
    %27 = arith.truncf %26 : vector<128x64xf32> to vector<128x64xbf16>
    %c0_19 = arith.constant 0 : index
    %c0_20 = arith.constant 0 : index
    %28 = vector.load %arg8[%c0_19, %c0_20] : memref<64x128xbf16, #tpu.memory_space<vmem>>, vector<64x128xbf16>
    %cst_21 = arith.constant dense<0.000000e+00> : vector<128x128xf32>
    %29 = tpu.matmul %27, %28, %cst_21 {dimension_numbers = #tpu.dot_dimension_numbers<[1], [0], [0], [1], [0, 0, 1, 1], [], []>} : vector<128x64xbf16>, vector<64x128xbf16>, vector<128x128xf32> -> vector<128x128xf32>
    %c0_22 = arith.constant 0 : index
    %c0_23 = arith.constant 0 : index
    %30 = vector.load %arg9[%c0_22, %c0_23] : memref<1x128xf32, #tpu.memory_space<vmem>>, vector<1x128xf32>
    %31 = vector.broadcast %30 : vector<1x128xf32> to vector<128x128xf32>
    %32 = arith.addf %29, %31 : vector<128x128xf32>
    %33 = vector.extract_strided_slice %32 {offsets = [0, 0], sizes = [128, 64], strides = [1, 1]} : vector<128x128xf32> to vector<128x64xf32>
    %34 = math.tanh %33 : vector<128x64xf32>
    %35 = vector.extract_strided_slice %32 {offsets = [0, 64], sizes = [128, 64], strides = [1, 1]} : vector<128x128xf32> to vector<128x64xf32>
    %36 = arith.negf %35 : vector<128x64xf32>
    %37 = math.exp %36 : vector<128x64xf32>
    %cst_24 = arith.constant 1.000000e+00 : f32
    %38 = vector.broadcast %cst_24 : f32 to vector<128x64xf32>
    %39 = arith.addf %38, %37 : vector<128x64xf32>
    %40 = arith.divf %38, %39 : vector<128x64xf32>
    %41 = arith.mulf %34, %40 : vector<128x64xf32>
    %c0_25 = arith.constant 0 : index
    %c0_26 = arith.constant 0 : index
    %42 = vector.load %arg10[%c0_25, %c0_26] : memref<1x64xf32, #tpu.memory_space<vmem>>, vector<1x64xf32>
    %43 = vector.broadcast %42 : vector<1x64xf32> to vector<128x64xf32>
    %44 = arith.mulf %41, %43 : vector<128x64xf32>
    %cst_27 = arith.constant dense<0.000000e+00> : vector<128xf32>
    %45 = vector.multi_reduction <add>, %44, %cst_27 [1] : vector<128x64xf32> to vector<128xf32>
    %46 = vector.shape_cast %45 : vector<128xf32> to vector<128x1xf32>
    %c0_28 = arith.constant 0 : index
    %c0_29 = arith.constant 0 : index
    %47 = vector.load %arg11[%c0_28, %c0_29] : memref<1x1xf32, #tpu.memory_space<vmem>>, vector<1x1xf32>
    %48 = vector.broadcast %47 : vector<1x1xf32> to vector<128x1xf32>
    %49 = arith.addf %46, %48 : vector<128x1xf32>
    %c128_i32 = arith.constant 128 : i32
    %50 = arith.muli %arg0, %c128_i32 : i32
    %51 = tpu.iota {dimensions = array<i32: 0>} : vector<128x1xi32>
    %52 = vector.broadcast %50 : i32 to vector<128x1xi32>
    %53 = arith.addi %52, %51 : vector<128x1xi32>
    %c8_i32 = arith.constant 8 : i32
    %54 = vector.broadcast %c8_i32 : i32 to vector<128x1xi32>
    %55 = arith.cmpi slt, %53, %54 : vector<128x1xi32>
    %cst_30 = arith.constant -1.000000e+30 : f32
    %56 = vector.broadcast %cst_30 : f32 to vector<128x1xf32>
    %57 = arith.select %55, %49, %56 : vector<128x1xi1>, vector<128x1xf32>
    %58 = tpu.transpose %57, [1, 0] : vector<128x1xf32> -> vector<1x128xf32>
    %c0_31 = arith.constant 0 : index
    %c0_32 = arith.constant 0 : index
    %c0_33 = arith.constant 0 : index
    %59 = vector.load %arg15[%c0_31, %c0_32, %c0_33] : memref<1x1x128xf32, #tpu.memory_space<vmem>>, vector<1x1x128xf32>
    %60 = vector.shape_cast %59 : vector<1x1x128xf32> to vector<1x128xf32>
    %61 = vector.shape_cast %58 : vector<1x128xf32> to vector<1x1x128xf32>
    tpu.vector_store %arg15[%c0_31, %c0_32, %c0_33], %61 {strides = array<i32>} : memref<1x1x128xf32, #tpu.memory_space<vmem>>, vector<1x1x128xf32>,
    %c0_34 = arith.constant 0 : index
    %c0_35 = arith.constant 0 : index
    %62 = vector.load %arg17[%c0_34, %c0_35] : memref<1x1xf32, #tpu.memory_space<vmem>>, vector<1x1xf32>
    %cst_36 = arith.constant dense<0xFF800000> : vector<1xf32>
    %63 = vector.multi_reduction <maximumf>, %57, %cst_36 [0] : vector<128x1xf32> to vector<1xf32>
    %64 = vector.shape_cast %63 : vector<1xf32> to vector<1x1xf32>
    %65 = arith.maximumf %62, %64 : vector<1x1xf32>
    %66 = arith.subf %62, %65 : vector<1x1xf32>
    %67 = math.exp %66 : vector<1x1xf32>
    %68 = vector.broadcast %65 : vector<1x1xf32> to vector<128x1xf32>
    %69 = arith.subf %57, %68 : vector<128x1xf32>
    %70 = math.exp %69 : vector<128x1xf32>
    %c0_37 = arith.constant 0 : index
    %c0_38 = arith.constant 0 : index
    %71 = vector.load %arg18[%c0_37, %c0_38] : memref<1x1xf32, #tpu.memory_space<vmem>>, vector<1x1xf32>
    %72 = arith.mulf %67, %71 : vector<1x1xf32>
    %cst_39 = arith.constant dense<0.000000e+00> : vector<1xf32>
    %73 = vector.multi_reduction <add>, %70, %cst_39 [0] : vector<128x1xf32> to vector<1xf32>
    %74 = vector.shape_cast %73 : vector<1xf32> to vector<1x1xf32>
    %75 = arith.addf %72, %74 : vector<1x1xf32>
    %c0_40 = arith.constant 0 : index
    %c0_41 = arith.constant 0 : index
    %76 = vector.load %arg18[%c0_40, %c0_41] : memref<1x1xf32, #tpu.memory_space<vmem>>, vector<1x1xf32>
    tpu.vector_store %arg18[%c0_40, %c0_41], %75 {strides = array<i32>} : memref<1x1xf32, #tpu.memory_space<vmem>>, vector<1x1xf32>,
    %c0_42 = arith.constant 0 : index
    %c0_43 = arith.constant 0 : index
    %77 = vector.load %arg19[%c0_42, %c0_43] : memref<1x64xf32, #tpu.memory_space<vmem>>, vector<1x64xf32>
    %78 = vector.broadcast %67 : vector<1x1xf32> to vector<1x64xf32>
    %79 = arith.mulf %78, %77 : vector<1x64xf32>
    %80 = vector.broadcast %70 : vector<128x1xf32> to vector<128x64xf32>
    %81 = arith.mulf %80, %26 : vector<128x64xf32>
    %cst_44 = arith.constant dense<0.000000e+00> : vector<64xf32>
    %82 = vector.multi_reduction <add>, %81, %cst_44 [0] : vector<128x64xf32> to vector<64xf32>
    %83 = vector.shape_cast %82 : vector<64xf32> to vector<1x64xf32>
    %84 = arith.addf %79, %83 : vector<1x64xf32>
    %c0_45 = arith.constant 0 : index
    %c0_46 = arith.constant 0 : index
    %85 = vector.load %arg19[%c0_45, %c0_46] : memref<1x64xf32, #tpu.memory_space<vmem>>, vector<1x64xf32>
    tpu.vector_store %arg19[%c0_45, %c0_46], %84 {strides = array<i32>} : memref<1x64xf32, #tpu.memory_space<vmem>>, vector<1x64xf32>,
    %c0_47 = arith.constant 0 : index
    %c0_48 = arith.constant 0 : index
    %86 = vector.load %arg17[%c0_47, %c0_48] : memref<1x1xf32, #tpu.memory_space<vmem>>, vector<1x1xf32>
    tpu.vector_store %arg17[%c0_47, %c0_48], %65 {strides = array<i32>} : memref<1x1xf32, #tpu.memory_space<vmem>>, vector<1x1xf32>,
    %c0_i32_49 = arith.constant 0 : i32
    %87 = arith.cmpi eq, %arg0, %c0_i32_49 : i32
    %88 = arith.extui %87 : i1 to i32
    %c0_i32_50 = arith.constant 0 : i32
    %89 = arith.cmpi ne, %88, %c0_i32_50 : i32
    scf.if %89 {
      %c0_51 = arith.constant 0 : index
      %c0_52 = arith.constant 0 : index
      %90 = vector.load %arg18[%c0_51, %c0_52] : memref<1x1xf32, #tpu.memory_space<vmem>>, vector<1x1xf32>
      %c0_53 = arith.constant 0 : index
      %c0_54 = arith.constant 0 : index
      %91 = vector.load %arg19[%c0_53, %c0_54] : memref<1x64xf32, #tpu.memory_space<vmem>>, vector<1x64xf32>
      %92 = vector.broadcast %90 : vector<1x1xf32> to vector<1x64xf32>
      %93 = arith.divf %91, %92 : vector<1x64xf32>
      %c0_55 = arith.constant 0 : index
      %c0_56 = arith.constant 0 : index
      %94 = vector.load %arg12[%c0_55, %c0_56] : memref<64x2xf32, #tpu.memory_space<vmem>>, vector<64x2xf32>
      %cst_57 = arith.constant dense<0.000000e+00> : vector<1x2xf32>
      %95 = tpu.matmul %93, %94, %cst_57 {dimension_numbers = #tpu.dot_dimension_numbers<[1], [0], [0], [1], [0, 0, 1, 1], [], []>} : vector<1x64xf32>, vector<64x2xf32>, vector<1x2xf32> -> vector<1x2xf32>
      %c0_58 = arith.constant 0 : index
      %c0_59 = arith.constant 0 : index
      %96 = vector.load %arg13[%c0_58, %c0_59] : memref<1x2xf32, #tpu.memory_space<vmem>>, vector<1x2xf32>
      %97 = arith.addf %95, %96 : vector<1x2xf32>
      %c0_60 = arith.constant 0 : index
      %c0_61 = arith.constant 0 : index
      %98 = vector.load %arg14[%c0_60, %c0_61] : memref<1x2xf32, #tpu.memory_space<vmem>>, vector<1x2xf32>
      tpu.vector_store %arg14[%c0_60, %c0_61], %97 {strides = array<i32>} : memref<1x2xf32, #tpu.memory_space<vmem>>, vector<1x2xf32>,
      %c0_62 = arith.constant 0 : index
      %c0_63 = arith.constant 0 : index
      %99 = vector.load %arg17[%c0_62, %c0_63] : memref<1x1xf32, #tpu.memory_space<vmem>>, vector<1x1xf32>
      %100 = math.log %90 : vector<1x1xf32>
      %101 = arith.addf %99, %100 : vector<1x1xf32>
      %c0_64 = arith.constant 0 : index
      %c0_65 = arith.constant 0 : index
      %102 = vector.load %arg16[%c0_64, %c0_65] : memref<1x1xf32, #tpu.memory_space<vmem>>, vector<1x1xf32>
      tpu.vector_store %arg16[%c0_64, %c0_65], %101 {strides = array<i32>} : memref<1x1xf32, #tpu.memory_space<vmem>>, vector<1x1xf32>,
    } else {
    }
    return
  }
  func.func @transform_0(%arg0: i32) -> (i32, i32) {
    %c0_i32 = arith.constant 0 : i32
    %c0_i32_0 = arith.constant 0 : i32
    return %arg0, %c0_i32 : i32, i32
  }
  func.func @transform_1(%arg0: i32) -> (i32, i32) {
    %c0_i32 = arith.constant 0 : i32
    %c0_i32_0 = arith.constant 0 : i32
    %c0_i32_1 = arith.constant 0 : i32
    return %c0_i32, %c0_i32_0 : i32, i32
  }
  func.func @transform_2(%arg0: i32) -> (i32, i32) {
    %c0_i32 = arith.constant 0 : i32
    %c0_i32_0 = arith.constant 0 : i32
    %c0_i32_1 = arith.constant 0 : i32
    return %c0_i32, %c0_i32_0 : i32, i32
  }
  func.func @transform_3(%arg0: i32) -> (i32, i32) {
    %c0_i32 = arith.constant 0 : i32
    %c0_i32_0 = arith.constant 0 : i32
    %c0_i32_1 = arith.constant 0 : i32
    return %c0_i32, %c0_i32_0 : i32, i32
  }
  func.func @transform_4(%arg0: i32) -> (i32, i32) {
    %c0_i32 = arith.constant 0 : i32
    %c0_i32_0 = arith.constant 0 : i32
    %c0_i32_1 = arith.constant 0 : i32
    return %c0_i32, %c0_i32_0 : i32, i32
  }
  func.func @transform_5(%arg0: i32) -> (i32, i32) {
    %c0_i32 = arith.constant 0 : i32
    %c0_i32_0 = arith.constant 0 : i32
    %c0_i32_1 = arith.constant 0 : i32
    return %c0_i32, %c0_i32_0 : i32, i32
  }
  func.func @transform_6(%arg0: i32) -> (i32, i32) {
    %c0_i32 = arith.constant 0 : i32
    %c0_i32_0 = arith.constant 0 : i32
    %c0_i32_1 = arith.constant 0 : i32
    return %c0_i32, %c0_i32_0 : i32, i32
  }
  func.func @transform_7(%arg0: i32) -> (i32, i32) {
    %c0_i32 = arith.constant 0 : i32
    %c0_i32_0 = arith.constant 0 : i32
    %c0_i32_1 = arith.constant 0 : i32
    return %c0_i32, %c0_i32_0 : i32, i32
  }
  func.func @transform_8(%arg0: i32) -> (i32, i32) {
    %c0_i32 = arith.constant 0 : i32
    %c0_i32_0 = arith.constant 0 : i32
    %c0_i32_1 = arith.constant 0 : i32
    return %c0_i32, %c0_i32_0 : i32, i32
  }
  func.func @transform_9(%arg0: i32) -> (i32, i32) {
    %c0_i32 = arith.constant 0 : i32
    %c0_i32_0 = arith.constant 0 : i32
    %c0_i32_1 = arith.constant 0 : i32
    return %c0_i32, %c0_i32_0 : i32, i32
  }
  func.func @transform_10(%arg0: i32) -> (i32, i32) {
    %c0_i32 = arith.constant 0 : i32
    %c0_i32_0 = arith.constant 0 : i32
    %c0_i32_1 = arith.constant 0 : i32
    return %c0_i32, %c0_i32_0 : i32, i32
  }
  func.func @transform_11(%arg0: i32) -> (i32, i32) {
    %c0_i32 = arith.constant 0 : i32
    %c0_i32_0 = arith.constant 0 : i32
    %c0_i32_1 = arith.constant 0 : i32
    return %c0_i32, %c0_i32_0 : i32, i32
  }
  func.func @transform_12(%arg0: i32) -> (i32, i32) {
    %c0_i32 = arith.constant 0 : i32
    %c0_i32_0 = arith.constant 0 : i32
    %c0_i32_1 = arith.constant 0 : i32
    return %c0_i32, %c0_i32_0 : i32, i32
  }
  func.func @transform_13(%arg0: i32) -> (i32, i32) {
    %c0_i32 = arith.constant 0 : i32
    %c0_i32_0 = arith.constant 0 : i32
    %c0_i32_1 = arith.constant 0 : i32
    return %c0_i32, %c0_i32_0 : i32, i32
  }
  func.func @transform_14(%arg0: i32) -> (i32, i32, i32) {
    %c0_i32 = arith.constant 0 : i32
    %c0_i32_0 = arith.constant 0 : i32
    %c0_i32_1 = arith.constant 0 : i32
    return %arg0, %c0_i32, %c0_i32_0 : i32, i32, i32
  }
  func.func @transform_15(%arg0: i32) -> (i32, i32) {
    %c0_i32 = arith.constant 0 : i32
    %c0_i32_0 = arith.constant 0 : i32
    %c0_i32_1 = arith.constant 0 : i32
    return %c0_i32, %c0_i32_0 : i32, i32
  }
}

</mosaic_0001>

<llo_original>
// kernel: tpu_custom_call.1
$region0: #{tpu_custom_call.1}
  #allocation0 [shape = 'u32[]', space=smem, size = 0x4, offset = 0x4, fixed_abs, tag = 'smem constant byte address 0x4 - core index']
  #allocation1 [shape = 'u32[144,128]{1,0:T(1,128)}', space=vmem, size = 0x12000, scoped, tag = 'internal scratch']
  #allocation2 [shape = 'f32[1,1]{1,0:T(1,128)}', space=vmem, size = 0x200, scoped, tag = 'scratch operand']
  #allocation3 [shape = 'f32[1,1]{1,0:T(1,128)}', space=vmem, size = 0x200, scoped, tag = 'scratch operand']
  #allocation4 [shape = 'f32[1,64]{1,0:T(1,128)}', space=vmem, size = 0x200, scoped, tag = 'scratch operand']
  #allocation5 [shape = 'f32[1,1]{1,0:T(1,128)S(1)}', space=vmem, size = 0x200, scoped, tag = 'scoped memory for tpu_custom_call.1']
  %s0 = inlined_call_operand.vmem [shape: bf16[128,32], index: 0, kind: input, shape index: {}]
  %s1 = inlined_call_operand.vmem [shape: bf16[32,256], index: 1, kind: input, shape index: {}]
  %s2 = inlined_call_operand.vmem [shape: f32[1,256], index: 2, kind: input, shape index: {}]
  %s3 = inlined_call_operand.vmem [shape: bf16[256,128], index: 3, kind: input, shape index: {}]
  %s4 = inlined_call_operand.vmem [shape: f32[1,128], index: 4, kind: input, shape index: {}]
  %s5 = inlined_call_operand.vmem [shape: bf16[128,64], index: 5, kind: input, shape index: {}]
  %s6 = inlined_call_operand.vmem [shape: f32[1,64], index: 6, kind: input, shape index: {}]
  %s7 = inlined_call_operand.vmem [shape: bf16[64,128], index: 7, kind: input, shape index: {}]
  %s8 = inlined_call_operand.vmem [shape: f32[1,128], index: 8, kind: input, shape index: {}]
  %s9 = inlined_call_operand.vmem [shape: f32[1,64], index: 9, kind: input, shape index: {}]
  %s10 = inlined_call_operand.<no memory space> [shape: f32[1,1], index: 10, kind: input, shape index: {}]
  %s11 = inlined_call_operand.vmem [shape: f32[64,2], index: 11, kind: input, shape index: {}]
  %s12 = inlined_call_operand.vmem [shape: f32[1,2], index: 12, kind: input, shape index: {}]
  %s13 = inlined_call_operand.hbm [shape: f32[1,2], index: 13, kind: output, shape index: {0}]
  %s14 = inlined_call_operand.hbm [shape: f32[1,1,128], index: 14, kind: output, shape index: {1}]
  %s15 = inlined_call_operand.hbm [shape: f32[1,1], index: 15, kind: output, shape index: {2}]
  %16 = xla_tuple %s13, %s14, %s15
  %s17 = sld [smem:[#allocation0]]
  $region86: #{tpu_custom_call.1} parent=0
    _
  %s19 = ssub.s32 1, %s17
  %s20 = scalar_select 0, %s19, %s17
  %v21 = vstv %s10
  %22 = vst [vmem:[#allocation5] sm:$0x1] %v21
  $region1: #{tpu_custom_call.1} parent=0
    #allocation6 [shape = 'u8[512]{0}', space=vmem, size = 0x400, scoped, tag = 'output window, operand 0, single buffered']
    #allocation7 [shape = 's32[1]{0}', space=sflag, size = 0x4, scoped, tag = 'scoped memory for tpu_custom_call.1']
    #allocation8 [shape = 'u8[512]{0}', space=vmem, size = 0x400, scoped, tag = 'output window, operand 1, single buffered']
    #allocation9 [shape = 's32[1]{0}', space=sflag, size = 0x4, scoped, tag = 'scoped memory for tpu_custom_call.1']
    #allocation10 [shape = 'u8[512]{0}', space=vmem, size = 0x400, scoped, tag = 'output window, operand 2, single buffered']
    %23 = vsyncpa [#allocation7], 0
    %24 = vsyncpa [#allocation9], 0
    // Predicated region
    $region2: #{tpu_custom_call.1} parent=1 // pred_check
      _
    $region3: #{tpu_custom_call.1} parent=1 // pred_check_branch
      %26 = sbr.rel (0) target = $region5
    $region4: #{tpu_custom_call.1} parent=1 // pred_region
      _
    $region5: #{tpu_custom_call.1} parent=1 // pred_fallthru
      _
    // Predicated region
    $region6: #{tpu_custom_call.1} parent=1 // pred_check
      _
    $region7: #{tpu_custom_call.1} parent=1 // pred_check_branch
      %28 = sbr.rel (0) target = $region9
    $region8: #{tpu_custom_call.1} parent=1 // pred_region
      _
    $region9: #{tpu_custom_call.1} parent=1 // pred_fallthru
      _
    // Predicated region
    $region10: #{tpu_custom_call.1} parent=1 // pred_check
      _
    $region11: #{tpu_custom_call.1} parent=1 // pred_check_branch
      %30 = sbr.rel (0) target = $region13
    $region12: #{tpu_custom_call.1} parent=1 // pred_region
      _
    $region13: #{tpu_custom_call.1} parent=1 // pred_fallthru
      _
    // Predicated region
    $region14: #{tpu_custom_call.1} parent=1 // pred_check
      _
    $region15: #{tpu_custom_call.1} parent=1 // pred_check_branch
      %32 = sbr.rel (0) target = $region17
    $region16: #{tpu_custom_call.1} parent=1 // pred_region
      _
    $region17: #{tpu_custom_call.1} parent=1 // pred_fallthru
      _
    // Predicated region
    $region18: #{tpu_custom_call.1} parent=1 // pred_check
      _
    $region19: #{tpu_custom_call.1} parent=1 // pred_check_branch
      %34 = sbr.rel (0) target = $region21
    $region20: #{tpu_custom_call.1} parent=1 // pred_region
      _
    $region21: #{tpu_custom_call.1} parent=1 // pred_fallthru
      _
    // Predicated region
    $region22: #{tpu_custom_call.1} parent=1 // pred_check
      _
    $region23: #{tpu_custom_call.1} parent=1 // pred_check_branch
      %36 = sbr.rel (0) target = $region25
    $region24: #{tpu_custom_call.1} parent=1 // pred_region
      _
    $region25: #{tpu_custom_call.1} parent=1 // pred_fallthru
      _
    // Predicated region
    $region26: #{tpu_custom_call.1} parent=1 // pred_check
      _
    $region27: #{tpu_custom_call.1} parent=1 // pred_check_branch
      %38 = sbr.rel (0) target = $region29
    $region28: #{tpu_custom_call.1} parent=1 // pred_region
      _
    $region29: #{tpu_custom_call.1} parent=1 // pred_fallthru
      _
    // Predicated region
    $region30: #{tpu_custom_call.1} parent=1 // pred_check
      _
    $region31: #{tpu_custom_call.1} parent=1 // pred_check_branch
      %40 = sbr.rel (0) target = $region33
    $region32: #{tpu_custom_call.1} parent=1 // pred_region
      _
    $region33: #{tpu_custom_call.1} parent=1 // pred_fallthru
      _
    // Predicated region
    $region34: #{tpu_custom_call.1} parent=1 // pred_check
      _
    $region35: #{tpu_custom_call.1} parent=1 // pred_check_branch
      %42 = sbr.rel (0) target = $region37
    $region36: #{tpu_custom_call.1} parent=1 // pred_region
      _
    $region37: #{tpu_custom_call.1} parent=1 // pred_fallthru
      _
    // Predicated region
    $region38: #{tpu_custom_call.1} parent=1 // pred_check
      _
    $region39: #{tpu_custom_call.1} parent=1 // pred_check_branch
      %44 = sbr.rel (0) target = $region41
    $region40: #{tpu_custom_call.1} parent=1 // pred_region
      _
    $region41: #{tpu_custom_call.1} parent=1 // pred_fallthru
      _
    // Predicated region
    $region42: #{tpu_custom_call.1} parent=1 // pred_check
      _
    $region43: #{tpu_custom_call.1} parent=1 // pred_check_branch
      %46 = sbr.rel (0) target = $region45
    $region44: #{tpu_custom_call.1} parent=1 // pred_region
      _
    $region45: #{tpu_custom_call.1} parent=1 // pred_fallthru
      _
    // Predicated region
    $region46: #{tpu_custom_call.1} parent=1 // pred_check
      _
    $region47: #{tpu_custom_call.1} parent=1 // pred_check_branch
      %48 = sbr.rel (0) target = $region49
    $region48: #{tpu_custom_call.1} parent=1 // pred_region
      _
    $region49: #{tpu_custom_call.1} parent=1 // pred_fallthru
      _
    // Predicated region
    $region50: #{tpu_custom_call.1} parent=1 // pred_check
      _
    $region51: #{tpu_custom_call.1} parent=1 // pred_check_branch
      %50 = sbr.rel (0) target = $region53
    $region52: #{tpu_custom_call.1} parent=1 // pred_region
      _
    $region53: #{tpu_custom_call.1} parent=1 // pred_fallthru
      _
    %p52 = scmp.eq.s32.totalorder 0, 0
    // Predicated region
    $region54: #{tpu_custom_call.1} parent=1 // pred_check
      %p53 = pneg %p52
    $region55: #{tpu_custom_call.1} parent=1 // pred_check_branch
      %55 = sbr.rel (%p53) target = $region57
    $region56: #{tpu_custom_call.1} parent=1 // pred_region
      %vm56 = vcmask 0
      %57 = vst.msk [vmem:[#allocation2] sm:$0x1] %vm56, -1e+30
      %58 = vst.msk [vmem:[#allocation3] sm:$0x1] %vm56, 0.0
      %vm59 = vcmask 516096
      %60 = vst.msk [vmem:[#allocation4] sm:$0x1] %vm59, 0.0
    $region57: #{tpu_custom_call.1} parent=1 // pred_fallthru
      _
    %v61 = vld [vmem:[%s0] sm:$0xf]
    %v62 = vld [vmem:[%s0 + $0x4] sm:$0xf]
    %v63 = vld [vmem:[%s0 + $0x8] sm:$0xf]
    %v64 = vld [vmem:[%s0 + $0xc] sm:$0xf]
    %v65 = vld [vmem:[%s0 + $0x10] sm:$0xf]
    %v66 = vld [vmem:[%s0 + $0x14] sm:$0xf]
    %v67 = vld [vmem:[%s0 + $0x18] sm:$0xf]
    %v68 = vld [vmem:[%s0 + $0x1c] sm:$0xf]
    %v69 = vld [vmem:[%s0 + $0x20] sm:$0xf]
    %v70 = vld [vmem:[%s0 + $0x24] sm:$0xf]
    %v71 = vld [vmem:[%s0 + $0x28] sm:$0xf]
    %v72 = vld [vmem:[%s0 + $0x2c] sm:$0xf]
    %v73 = vld [vmem:[%s0 + $0x30] sm:$0xf]
    %v74 = vld [vmem:[%s0 + $0x34] sm:$0xf]
    %v75 = vld [vmem:[%s0 + $0x38] sm:$0xf]
    %v76 = vld [vmem:[%s0 + $0x3c] sm:$0xf]
    %v77 = vld [vmem:[%s1] sm:$0xff]
    %v78 = vld [vmem:[%s1 + $0x8] sm:$0xff]
    %v79 = vld [vmem:[%s1 + $0x10] sm:$0xff]
    %v80 = vld [vmem:[%s1 + $0x18] sm:$0xff]
    %v81 = vld [vmem:[%s2] sm:$0x3]
    %v83 = vlaneseq
    %v84 = vshrl.u32 %v83, 7
    %v85 = vsub.s32 0, %v84
    %v86 = vrot.slane %v81, %v85
    %v87 = vlaneseq
    %v88 = vshrl.u32 %v87, 7
    %v89 = vsub.s32 1, %v88
    %v90 = vrot.slane %v81, %v89
    %v109 = vunpack.c.l.b16 %v61
    %v110 = vunpack.c.l.b16 %v62
    %v111 = vunpack.c.l.b16 %v63
    %v112 = vunpack.c.l.b16 %v64
    %v113 = vunpack.c.l.b16 %v65
    %v114 = vunpack.c.l.b16 %v66
    %v115 = vunpack.c.l.b16 %v67
    %v116 = vunpack.c.l.b16 %v68
    %v117 = vunpack.c.l.b16 %v69
    %v118 = vunpack.c.l.b16 %v70
    %v119 = vunpack.c.l.b16 %v71
    %v120 = vunpack.c.l.b16 %v72
    %v121 = vunpack.c.l.b16 %v73
    %v122 = vunpack.c.l.b16 %v74
    %v123 = vunpack.c.l.b16 %v75
    %v124 = vunpack.c.l.b16 %v76
    %v125 = vpack.c.b16 %v110, %v109
    %v126 = vpack.c.b16 %v112, %v111
    %v127 = vpack.c.b16 %v114, %v113
    %v128 = vpack.c.b16 %v116, %v115
    %v129 = vpack.c.b16 %v118, %v117
    %v130 = vpack.c.b16 %v120, %v119
    %v131 = vpack.c.b16 %v122, %v121
    %v132 = vpack.c.b16 %v124, %v123
    %v137 = vunpack.c.l.b16 %v77
    %v138 = vunpack.c.h.b16 %v77
    %v139 = vunpack.c.l.b16 %v78
    %v140 = vunpack.c.h.b16 %v78
    %v141 = vunpack.c.l.b16 %v79
    %v142 = vunpack.c.h.b16 %v79
    %v143 = vunpack.c.l.b16 %v80
    %v144 = vunpack.c.h.b16 %v80
    %v145 = vpack.c.b16 %v139, %v137
    %v146 = vpack.c.b16 %v140, %v138
    %v147 = vpack.c.b16 %v143, %v141
    %v148 = vpack.c.b16 %v144, %v142
    %vm153 = vcmask 261120
    %v155 = vsel %vm153, %v125, 0
    %v158 = vsel %vm153, %v126, 0
    %v161 = vsel %vm153, %v127, 0
    %v164 = vsel %vm153, %v128, 0
    %v167 = vsel %vm153, %v129, 0
    %v170 = vsel %vm153, %v130, 0
    %v173 = vsel %vm153, %v131, 0
    %v176 = vsel %vm153, %v132, 0
    %178 = vmatprep.subr.bf16.mxu0 %v146
    %179 = vmatpush1.bf16.msra.mxu0 %v145
    %180 = vmatprep.subr.bf16.mxu0 %v148
    %181 = vmatpush1.bf16.msra.mxu0 %v147
    %182 = vmatprep.subr.bf16.mxu0 0
    %183 = vmatpush1.bf16.msra.mxu0 0
    %184 = vmatprep.subr.bf16.mxu0 0
    %185 = vmatpush1.bf16.msra.mxu0 0
    %186 = vmatprep.subr.bf16.mxu0 0
    %187 = vmatpush1.bf16.msra.mxu0 0
    %188 = vmatprep.subr.bf16.mxu0 0
    %189 = vmatpush1.bf16.msra.mxu0 0
    %190 = vmatprep.subr.bf16.mxu0 0
    %191 = vmatpush1.bf16.msra.mxu0 0
    %192 = vmatprep.subr.bf16.mxu0 0
    %193 = vmatpush1.bf16.msra.mxu0 0
    %194 = vmatprep.subr.bf16.mxu0 0
    %195 = vmatpush1.bf16.msra.mxu0 0
    %196 = vmatprep.subr.bf16.mxu0 0
    %197 = vmatpush1.bf16.msra.mxu0 0
    %198 = vmatprep.subr.bf16.mxu0 0
    %199 = vmatpush1.bf16.msra.mxu0 0
    %200 = vmatprep.subr.bf16.mxu0 0
    %201 = vmatpush1.bf16.msra.mxu0 0
    %202 = vmatprep.subr.bf16.mxu0 0
    %203 = vmatpush1.bf16.msra.mxu0 0
    %204 = vmatprep.subr.bf16.mxu0 0
    %205 = vmatpush1.bf16.msra.mxu0 0
    %206 = vmatprep.subr.bf16.mxu0 0
    %207 = vmatpush1.bf16.msra.mxu0 0
    %208 = vmatprep.subr.bf16.mxu0 0
    %209 = vmatpush1.bf16.msra.mxu0 0
    %210 = vmatprep.mubr.bf16.mxu0 0
    %211 = vmatmul.mubr.bf16.gmra.mrb[0].mxu0 %v155
    %v212 = vpop.f32.mrb[0].mxu0
    %v213 = vadd.f32 %v86, %v212
    %v214 = vpop.f32.mrb[0].mxu0
    %v215 = vadd.f32 %v90, %v214
    %v216 = vpop.f32.mrb[0].mxu0
    %v217 = vadd.f32 %v86, %v216
    %v218 = vpop.f32.mrb[0].mxu0
    %v219 = vadd.f32 %v90, %v218
    %220 = vmatprep.mubr.bf16.mxu0 0
    %221 = vmatmul.mubr.bf16.gmra.mrb[0].mxu0 %v158
    %v222 = vpop.f32.mrb[0].mxu0
    %v223 = vadd.f32 %v86, %v222
    %v224 = vpop.f32.mrb[0].mxu0
    %v225 = vadd.f32 %v90, %v224
    %v226 = vpop.f32.mrb[0].mxu0
    %v227 = vadd.f32 %v86, %v226
    %v228 = vpop.f32.mrb[0].mxu0
    %v229 = vadd.f32 %v90, %v228
    %230 = vmatprep.mubr.bf16.mxu0 0
    %231 = vmatmul.mubr.bf16.gmra.mrb[0].mxu0 %v161
    %v232 = vpop.f32.mrb[0].mxu0
    %v233 = vadd.f32 %v86, %v232
    %v234 = vpop.f32.mrb[0].mxu0
    %v235 = vadd.f32 %v90, %v234
    %v236 = vpop.f32.mrb[0].mxu0
    %v237 = vadd.f32 %v86, %v236
    %v238 = vpop.f32.mrb[0].mxu0
    %v239 = vadd.f32 %v90, %v238
    %240 = vmatprep.mubr.bf16.mxu0 0
    %241 = vmatmul.mubr.bf16.gmra.mrb[0].mxu0 %v164
    %v242 = vpop.f32.mrb[0].mxu0
    %v243 = vadd.f32 %v86, %v242
    %v244 = vpop.f32.mrb[0].mxu0
    %v245 = vadd.f32 %v90, %v244
    %v246 = vpop.f32.mrb[0].mxu0
    %v247 = vadd.f32 %v86, %v246
    %v248 = vpop.f32.mrb[0].mxu0
    %v249 = vadd.f32 %v90, %v248
    %250 = vmatprep.mubr.bf16.mxu0 0
    %251 = vmatmul.mubr.bf16.gmra.mrb[0].mxu0 %v167
    %v252 = vpop.f32.mrb[0].mxu0
    %v253 = vadd.f32 %v86, %v252
    %v254 = vpop.f32.mrb[0].mxu0
    %v255 = vadd.f32 %v90, %v254
    %v256 = vpop.f32.mrb[0].mxu0
    %v257 = vadd.f32 %v86, %v256
    %v258 = vpop.f32.mrb[0].mxu0
    %v259 = vadd.f32 %v90, %v258
    %260 = vmatprep.mubr.bf16.mxu0 0
    %261 = vmatmul.mubr.bf16.gmra.mrb[0].mxu0 %v170
    %v262 = vpop.f32.mrb[0].mxu0
    %v263 = vadd.f32 %v86, %v262
    %v264 = vpop.f32.mrb[0].mxu0
    %v265 = vadd.f32 %v90, %v264
    %v266 = vpop.f32.mrb[0].mxu0
    %v267 = vadd.f32 %v86, %v266
    %v268 = vpop.f32.mrb[0].mxu0
    %v269 = vadd.f32 %v90, %v268
    %270 = vmatprep.mubr.bf16.mxu0 0
    %271 = vmatmul.mubr.bf16.gmra.mrb[0].mxu0 %v173
    %v272 = vpop.f32.mrb[0].mxu0
    %v273 = vadd.f32 %v86, %v272
    %v274 = vpop.f32.mrb[0].mxu0
    %v275 = vadd.f32 %v90, %v274
    %v276 = vpop.f32.mrb[0].mxu0
    %v277 = vadd.f32 %v86, %v276
    %v278 = vpop.f32.mrb[0].mxu0
    %v279 = vadd.f32 %v90, %v278
    %280 = vmatprep.mubr.bf16.mxu0 0
    %281 = vmatmul.mubr.bf16.gmra.mrb[0].mxu0 %v176
    %v282 = vpop.f32.mrb[0].mxu0
    %v283 = vadd.f32 %v86, %v282
    %v284 = vpop.f32.mrb[0].mxu0
    %v285 = vadd.f32 %v90, %v284
    %v286 = vpop.f32.mrb[0].mxu0
    %v287 = vadd.f32 %v86, %v286
    %v288 = vpop.f32.mrb[0].mxu0
    %v289 = vadd.f32 %v90, %v288
    %290 = vdwg.mxu0
    %v291 = vmax.f32 %v213, 0.0
    %v292 = vmax.f32 %v215, 0.0
    %v293 = vmax.f32 %v217, 0.0
    %v294 = vmax.f32 %v219, 0.0
    %v295 = vmax.f32 %v223, 0.0
    %v296 = vmax.f32 %v225, 0.0
    %v297 = vmax.f32 %v227, 0.0
    %v298 = vmax.f32 %v229, 0.0
    %v299 = vmax.f32 %v233, 0.0
    %v300 = vmax.f32 %v235, 0.0
    %v301 = vmax.f32 %v237, 0.0
    %v302 = vmax.f32 %v239, 0.0
    %v303 = vmax.f32 %v243, 0.0
    %v304 = vmax.f32 %v245, 0.0
    %v305 = vmax.f32 %v247, 0.0
    %v306 = vmax.f32 %v249, 0.0
    %v307 = vmax.f32 %v253, 0.0
    %v308 = vmax.f32 %v255, 0.0
    %v309 = vmax.f32 %v257, 0.0
    %v310 = vmax.f32 %v259, 0.0
    %v311 = vmax.f32 %v263, 0.0
    %v312 = vmax.f32 %v265, 0.0
    %v313 = vmax.f32 %v267, 0.0
    %v314 = vmax.f32 %v269, 0.0
    %v315 = vmax.f32 %v273, 0.0
    %v316 = vmax.f32 %v275, 0.0
    %v317 = vmax.f32 %v277, 0.0
    %v318 = vmax.f32 %v279, 0.0
    %v319 = vmax.f32 %v283, 0.0
    %v320 = vmax.f32 %v285, 0.0
    %v321 = vmax.f32 %v287, 0.0
    %v322 = vmax.f32 %v289, 0.0
    %v323 = vpack.c.bf16 %v293, %v291
    %v324 = vpack.c.bf16 %v294, %v292
    %v325 = vpack.c.bf16 %v297, %v295
    %v326 = vpack.c.bf16 %v298, %v296
    %v327 = vpack.c.bf16 %v301, %v299
    %v328 = vpack.c.bf16 %v302, %v300
    %v329 = vpack.c.bf16 %v305, %v303
    %v330 = vpack.c.bf16 %v306, %v304
    %v331 = vpack.c.bf16 %v309, %v307
    %v332 = vpack.c.bf16 %v310, %v308
    %v333 = vpack.c.bf16 %v313, %v311
    %v334 = vpack.c.bf16 %v314, %v312
    %v335 = vpack.c.bf16 %v317, %v315
    %v336 = vpack.c.bf16 %v318, %v316
    %v337 = vpack.c.bf16 %v321, %v319
    %v338 = vpack.c.bf16 %v322, %v320
    %v339 = vld [vmem:[%s3] sm:$0xf]
    %v340 = vld [vmem:[%s3 + $0x4] sm:$0xf]
    %v341 = vld [vmem:[%s3 + $0x8] sm:$0xf]
    %v342 = vld [vmem:[%s3 + $0xc] sm:$0xf]
    %v343 = vld [vmem:[%s3 + $0x10] sm:$0xf]
    %v344 = vld [vmem:[%s3 + $0x14] sm:$0xf]
    %v345 = vld [vmem:[%s3 + $0x18] sm:$0xf]
    %v346 = vld [vmem:[%s3 + $0x1c] sm:$0xf]
    %v347 = vld [vmem:[%s3 + $0x20] sm:$0xf]
    %v348 = vld [vmem:[%s3 + $0x24] sm:$0xf]
    %v349 = vld [vmem:[%s3 + $0x28] sm:$0xf]
    %v350 = vld [vmem:[%s3 + $0x2c] sm:$0xf]
    %v351 = vld [vmem:[%s3 + $0x30] sm:$0xf]
    %v352 = vld [vmem:[%s3 + $0x34] sm:$0xf]
    %v353 = vld [vmem:[%s3 + $0x38] sm:$0xf]
    %v354 = vld [vmem:[%s3 + $0x3c] sm:$0xf]
    %v355 = vld [vmem:[%s3 + $0x40] sm:$0xf]
    %v356 = vld [vmem:[%s3 + $0x44] sm:$0xf]
    %v357 = vld [vmem:[%s3 + $0x48] sm:$0xf]
    %v358 = vld [vmem:[%s3 + $0x4c] sm:$0xf]
    %v359 = vld [vmem:[%s3 + $0x50] sm:$0xf]
    %v360 = vld [vmem:[%s3 + $0x54] sm:$0xf]
    %v361 = vld [vmem:[%s3 + $0x58] sm:$0xf]
    %v362 = vld [vmem:[%s3 + $0x5c] sm:$0xf]
    %v363 = vld [vmem:[%s3 + $0x60] sm:$0xf]
    %v364 = vld [vmem:[%s3 + $0x64] sm:$0xf]
    %v365 = vld [vmem:[%s3 + $0x68] sm:$0xf]
    %v366 = vld [vmem:[%s3 + $0x6c] sm:$0xf]
    %v367 = vld [vmem:[%s3 + $0x70] sm:$0xf]
    %v368 = vld [vmem:[%s3 + $0x74] sm:$0xf]
    %v369 = vld [vmem:[%s3 + $0x78] sm:$0xf]
    %v370 = vld [vmem:[%s3 + $0x7c] sm:$0xf]
    %v371 = vld [vmem:[%s4] sm:$0x1]
    %v373 = vlaneseq
    %v374 = vshrl.u32 %v373, 7
    %v375 = vsub.s32 0, %v374
    %v376 = vrot.slane %v371, %v375
    %v410 = vunpack.c.l.b16 %v339
    %v411 = vunpack.c.l.b16 %v340
    %v412 = vunpack.c.l.b16 %v341
    %v413 = vunpack.c.l.b16 %v342
    %v414 = vunpack.c.l.b16 %v343
    %v415 = vunpack.c.l.b16 %v344
    %v416 = vunpack.c.l.b16 %v345
    %v417 = vunpack.c.l.b16 %v346
    %v418 = vunpack.c.l.b16 %v347
    %v419 = vunpack.c.l.b16 %v348
    %v420 = vunpack.c.l.b16 %v349
    %v421 = vunpack.c.l.b16 %v350
    %v422 = vunpack.c.l.b16 %v351
    %v423 = vunpack.c.l.b16 %v352
    %v424 = vunpack.c.l.b16 %v353
    %v425 = vunpack.c.l.b16 %v354
    %v426 = vunpack.c.l.b16 %v355
    %v427 = vunpack.c.l.b16 %v356
    %v428 = vunpack.c.l.b16 %v357
    %v429 = vunpack.c.l.b16 %v358
    %v430 = vunpack.c.l.b16 %v359
    %v431 = vunpack.c.l.b16 %v360
    %v432 = vunpack.c.l.b16 %v361
    %v433 = vunpack.c.l.b16 %v362
    %v434 = vunpack.c.l.b16 %v363
    %v435 = vunpack.c.l.b16 %v364
    %v436 = vunpack.c.l.b16 %v365
    %v437 = vunpack.c.l.b16 %v366
    %v438 = vunpack.c.l.b16 %v367
    %v439 = vunpack.c.l.b16 %v368
    %v440 = vunpack.c.l.b16 %v369
    %v441 = vunpack.c.l.b16 %v370
    %v442 = vpack.c.b16 %v411, %v410
    %v443 = vpack.c.b16 %v413, %v412
    %v444 = vpack.c.b16 %v415, %v414
    %v445 = vpack.c.b16 %v417, %v416
    %v446 = vpack.c.b16 %v419, %v418
    %v447 = vpack.c.b16 %v421, %v420
    %v448 = vpack.c.b16 %v423, %v422
    %v449 = vpack.c.b16 %v425, %v424
    %v450 = vpack.c.b16 %v427, %v426
    %v451 = vpack.c.b16 %v429, %v428
    %v452 = vpack.c.b16 %v431, %v430
    %v453 = vpack.c.b16 %v433, %v432
    %v454 = vpack.c.b16 %v435, %v434
    %v455 = vpack.c.b16 %v437, %v436
    %v456 = vpack.c.b16 %v439, %v438
    %v457 = vpack.c.b16 %v441, %v440
    %474 = vmatprep.subr.bf16.mxu0 0
    %475 = vmatpush1.bf16.msra.mxu0 %v442
    %476 = vmatprep.subr.bf16.mxu0 0
    %477 = vmatpush1.bf16.msra.mxu0 %v443
    %478 = vmatprep.subr.bf16.mxu0 0
    %479 = vmatpush1.bf16.msra.mxu0 %v444
    %480 = vmatprep.subr.bf16.mxu0 0
    %481 = vmatpush1.bf16.msra.mxu0 %v445
    %482 = vmatprep.subr.bf16.mxu0 0
    %483 = vmatpush1.bf16.msra.mxu0 %v446
    %484 = vmatprep.subr.bf16.mxu0 0
    %485 = vmatpush1.bf16.msra.mxu0 %v447
    %486 = vmatprep.subr.bf16.mxu0 0
    %487 = vmatpush1.bf16.msra.mxu0 %v448
    %488 = vmatprep.subr.bf16.mxu0 0
    %489 = vmatpush1.bf16.msra.mxu0 %v449
    %490 = vmatprep.subr.bf16.mxu0 0
    %491 = vmatpush1.bf16.msra.mxu0 %v450
    %492 = vmatprep.subr.bf16.mxu0 0
    %493 = vmatpush1.bf16.msra.mxu0 %v451
    %494 = vmatprep.subr.bf16.mxu0 0
    %495 = vmatpush1.bf16.msra.mxu0 %v452
    %496 = vmatprep.subr.bf16.mxu0 0
    %497 = vmatpush1.bf16.msra.mxu0 %v453
    %498 = vmatprep.subr.bf16.mxu0 0
    %499 = vmatpush1.bf16.msra.mxu0 %v454
    %500 = vmatprep.subr.bf16.mxu0 0
    %501 = vmatpush1.bf16.msra.mxu0 %v455
    %502 = vmatprep.subr.bf16.mxu0 0
    %503 = vmatpush1.bf16.msra.mxu0 %v456
    %504 = vmatprep.subr.bf16.mxu0 0
    %505 = vmatpush1.bf16.msra.mxu0 %v457
    %506 = vmatprep.mubr.bf16.mxu0 %v324
    %507 = vmatmul.mubr.bf16.gmra.mrb[0].mxu0 %v323
    %v508 = vpop.f32.mrb[0].mxu0
    %v509 = vadd.f32 %v376, %v508
    %v510 = vpop.f32.mrb[0].mxu0
    %v511 = vpop.f32.mrb[0].mxu0
    %v512 = vadd.f32 %v376, %v511
    %v513 = vpop.f32.mrb[0].mxu0
    %514 = vmatprep.mubr.bf16.mxu0 %v326
    %515 = vmatmul.mubr.bf16.gmra.mrb[0].mxu0 %v325
    %v516 = vpop.f32.mrb[0].mxu0
    %v517 = vadd.f32 %v376, %v516
    %v518 = vpop.f32.mrb[0].mxu0
    %v519 = vpop.f32.mrb[0].mxu0
    %v520 = vadd.f32 %v376, %v519
    %v521 = vpop.f32.mrb[0].mxu0
    %522 = vmatprep.mubr.bf16.mxu0 %v328
    %523 = vmatmul.mubr.bf16.gmra.mrb[0].mxu0 %v327
    %v524 = vpop.f32.mrb[0].mxu0
    %v525 = vadd.f32 %v376, %v524
    %v526 = vpop.f32.mrb[0].mxu0
    %v527 = vpop.f32.mrb[0].mxu0
    %v528 = vadd.f32 %v376, %v527
    %v529 = vpop.f32.mrb[0].mxu0
    %530 = vmatprep.mubr.bf16.mxu0 %v330
    %531 = vmatmul.mubr.bf16.gmra.mrb[0].mxu0 %v329
    %v532 = vpop.f32.mrb[0].mxu0
    %v533 = vadd.f32 %v376, %v532
    %v534 = vpop.f32.mrb[0].mxu0
    %v535 = vpop.f32.mrb[0].mxu0
    %v536 = vadd.f32 %v376, %v535
    %v537 = vpop.f32.mrb[0].mxu0
    %538 = vmatprep.mubr.bf16.mxu0 %v332
    %539 = vmatmul.mubr.bf16.gmra.mrb[0].mxu0 %v331
    %v540 = vpop.f32.mrb[0].mxu0
    %v541 = vadd.f32 %v376, %v540
    %v542 = vpop.f32.mrb[0].mxu0
    %v543 = vpop.f32.mrb[0].mxu0
    %v544 = vadd.f32 %v376, %v543
    %v545 = vpop.f32.mrb[0].mxu0
    %546 = vmatprep.mubr.bf16.mxu0 %v334
    %547 = vmatmul.mubr.bf16.gmra.mrb[0].mxu0 %v333
    %v548 = vpop.f32.mrb[0].mxu0
    %v549 = vadd.f32 %v376, %v548
    %v550 = vpop.f32.mrb[0].mxu0
    %v551 = vpop.f32.mrb[0].mxu0
    %v552 = vadd.f32 %v376, %v551
    %v553 = vpop.f32.mrb[0].mxu0
    %554 = vmatprep.mubr.bf16.mxu0 %v336
    %555 = vmatmul.mubr.bf16.gmra.mrb[0].mxu0 %v335
    %v556 = vpop.f32.mrb[0].mxu0
    %v557 = vadd.f32 %v376, %v556
    %v558 = vpop.f32.mrb[0].mxu0
    %v559 = vpop.f32.mrb[0].mxu0
    %v560 = vadd.f32 %v376, %v559
    %v561 = vpop.f32.mrb[0].mxu0
    %562 = vmatprep.mubr.bf16.mxu0 %v338
    %563 = vmatmul.mubr.bf16.gmra.mrb[0].mxu0 %v337
    %v564 = vpop.f32.mrb[0].mxu0
    %v565 = vadd.f32 %v376, %v564
    %v566 = vpop.f32.mrb[0].mxu0
    %v567 = vpop.f32.mrb[0].mxu0
    %v568 = vadd.f32 %v376, %v567
    %v569 = vpop.f32.mrb[0].mxu0
    %570 = vdwg.mxu0
    %v571 = vmax.f32 %v509, 0.0
    %v572 = vmax.f32 %v512, 0.0
    %v573 = vmax.f32 %v517, 0.0
    %v574 = vmax.f32 %v520, 0.0
    %v575 = vmax.f32 %v525, 0.0
    %v576 = vmax.f32 %v528, 0.0
    %v577 = vmax.f32 %v533, 0.0
    %v578 = vmax.f32 %v536, 0.0
    %v579 = vmax.f32 %v541, 0.0
    %v580 = vmax.f32 %v544, 0.0
    %v581 = vmax.f32 %v549, 0.0
    %v582 = vmax.f32 %v552, 0.0
    %v583 = vmax.f32 %v557, 0.0
    %v584 = vmax.f32 %v560, 0.0
    %v585 = vmax.f32 %v565, 0.0
    %v586 = vmax.f32 %v568, 0.0
    %v587 = vpack.c.bf16 %v572, %v571
    %v588 = vpack.c.bf16 %v574, %v573
    %v589 = vpack.c.bf16 %v576, %v575
    %v590 = vpack.c.bf16 %v578, %v577
    %v591 = vpack.c.bf16 %v580, %v579
    %v592 = vpack.c.bf16 %v582, %v581
    %v593 = vpack.c.bf16 %v584, %v583
    %v594 = vpack.c.bf16 %v586, %v585
    %v595 = vld [vmem:[%s5] sm:$0xf]
    %v596 = vld [vmem:[%s5 + $0x4] sm:$0xf]
    %v597 = vld [vmem:[%s5 + $0x8] sm:$0xf]
    %v598 = vld [vmem:[%s5 + $0xc] sm:$0xf]
    %v599 = vld [vmem:[%s5 + $0x10] sm:$0xf]
    %v600 = vld [vmem:[%s5 + $0x14] sm:$0xf]
    %v601 = vld [vmem:[%s5 + $0x18] sm:$0xf]
    %v602 = vld [vmem:[%s5 + $0x1c] sm:$0xf]
    %v603 = vld [vmem:[%s5 + $0x20] sm:$0xf]
    %v604 = vld [vmem:[%s5 + $0x24] sm:$0xf]
    %v605 = vld [vmem:[%s5 + $0x28] sm:$0xf]
    %v606 = vld [vmem:[%s5 + $0x2c] sm:$0xf]
    %v607 = vld [vmem:[%s5 + $0x30] sm:$0xf]
    %v608 = vld [vmem:[%s5 + $0x34] sm:$0xf]
    %v609 = vld [vmem:[%s5 + $0x38] sm:$0xf]
    %v610 = vld [vmem:[%s5 + $0x3c] sm:$0xf]
    %v611 = vld [vmem:[%s6] sm:$0x1]
    %v613 = vlaneseq
    %v614 = vshrl.u32 %v613, 7
    %v615 = vsub.s32 0, %v614
    %v616 = vrot.slane %v611, %v615
    %v634 = vunpack.c.l.b16 %v595
    %v635 = vunpack.c.l.b16 %v596
    %v636 = vunpack.c.l.b16 %v597
    %v637 = vunpack.c.l.b16 %v598
    %v638 = vunpack.c.l.b16 %v599
    %v639 = vunpack.c.l.b16 %v600
    %v640 = vunpack.c.l.b16 %v601
    %v641 = vunpack.c.l.b16 %v602
    %v642 = vunpack.c.l.b16 %v603
    %v643 = vunpack.c.l.b16 %v604
    %v644 = vunpack.c.l.b16 %v605
    %v645 = vunpack.c.l.b16 %v606
    %v646 = vunpack.c.l.b16 %v607
    %v647 = vunpack.c.l.b16 %v608
    %v648 = vunpack.c.l.b16 %v609
    %v649 = vunpack.c.l.b16 %v610
    %v650 = vpack.c.b16 %v635, %v634
    %v651 = vpack.c.b16 %v637, %v636
    %v652 = vpack.c.b16 %v639, %v638
    %v653 = vpack.c.b16 %v641, %v640
    %v654 = vpack.c.b16 %v643, %v642
    %v655 = vpack.c.b16 %v645, %v644
    %v656 = vpack.c.b16 %v647, %v646
    %v657 = vpack.c.b16 %v649, %v648
    %666 = vmatprep.subr.bf16.mxu0 0
    %667 = vmatpush1.bf16.msra.mxu0 %v650
    %668 = vmatprep.subr.bf16.mxu0 0
    %669 = vmatpush1.bf16.msra.mxu0 %v651
    %670 = vmatprep.subr.bf16.mxu0 0
    %671 = vmatpush1.bf16.msra.mxu0 %v652
    %672 = vmatprep.subr.bf16.mxu0 0
    %673 = vmatpush1.bf16.msra.mxu0 %v653
    %674 = vmatprep.subr.bf16.mxu0 0
    %675 = vmatpush1.bf16.msra.mxu0 %v654
    %676 = vmatprep.subr.bf16.mxu0 0
    %677 = vmatpush1.bf16.msra.mxu0 %v655
    %678 = vmatprep.subr.bf16.mxu0 0
    %679 = vmatpush1.bf16.msra.mxu0 %v656
    %680 = vmatprep.subr.bf16.mxu0 0
    %681 = vmatpush1.bf16.msra.mxu0 %v657
    %682 = vmatprep.subr.bf16.mxu0 0
    %683 = vmatpush1.bf16.msra.mxu0 0
    %684 = vmatprep.subr.bf16.mxu0 0
    %685 = vmatpush1.bf16.msra.mxu0 0
    %686 = vmatprep.subr.bf16.mxu0 0
    %687 = vmatpush1.bf16.msra.mxu0 0
    %688 = vmatprep.subr.bf16.mxu0 0
    %689 = vmatpush1.bf16.msra.mxu0 0
    %690 = vmatprep.subr.bf16.mxu0 0
    %691 = vmatpush1.bf16.msra.mxu0 0
    %692 = vmatprep.subr.bf16.mxu0 0
    %693 = vmatpush1.bf16.msra.mxu0 0
    %694 = vmatprep.subr.bf16.mxu0 0
    %695 = vmatpush1.bf16.msra.mxu0 0
    %696 = vmatprep.subr.bf16.mxu0 0
    %697 = vmatpush1.bf16.msra.mxu0 0
    %698 = vmatprep.mubr.bf16.mxu0 0
    %699 = vmatmul.mubr.bf16.gmra.mrb[0].mxu0 %v587
    %v700 = vpop.f32.mrb[0].mxu0
    %v701 = vadd.f32 %v616, %v700
    %v702 = vpop.f32.mrb[0].mxu0
    %v703 = vpop.f32.mrb[0].mxu0
    %v704 = vadd.f32 %v616, %v703
    %v705 = vpop.f32.mrb[0].mxu0
    %706 = vmatprep.mubr.bf16.mxu0 0
    %707 = vmatmul.mubr.bf16.gmra.mrb[0].mxu0 %v588
    %v708 = vpop.f32.mrb[0].mxu0
    %v709 = vadd.f32 %v616, %v708
    %v710 = vpop.f32.mrb[0].mxu0
    %v711 = vpop.f32.mrb[0].mxu0
    %v712 = vadd.f32 %v616, %v711
    %v713 = vpop.f32.mrb[0].mxu0
    %714 = vmatprep.mubr.bf16.mxu0 0
    %715 = vmatmul.mubr.bf16.gmra.mrb[0].mxu0 %v589
    %v716 = vpop.f32.mrb[0].mxu0
    %v717 = vadd.f32 %v616, %v716
    %v718 = vpop.f32.mrb[0].mxu0
    %v719 = vpop.f32.mrb[0].mxu0
    %v720 = vadd.f32 %v616, %v719
    %v721 = vpop.f32.mrb[0].mxu0
    %722 = vmatprep.mubr.bf16.mxu0 0
    %723 = vmatmul.mubr.bf16.gmra.mrb[0].mxu0 %v590
    %v724 = vpop.f32.mrb[0].mxu0
    %v725 = vadd.f32 %v616, %v724
    %v726 = vpop.f32.mrb[0].mxu0
    %v727 = vpop.f32.mrb[0].mxu0
    %v728 = vadd.f32 %v616, %v727
    %v729 = vpop.f32.mrb[0].mxu0
    %730 = vmatprep.mubr.bf16.mxu0 0
    %731 = vmatmul.mubr.bf16.gmra.mrb[0].mxu0 %v591
    %v732 = vpop.f32.mrb[0].mxu0
    %v733 = vadd.f32 %v616, %v732
    %v734 = vpop.f32.mrb[0].mxu0
    %v735 = vpop.f32.mrb[0].mxu0
    %v736 = vadd.f32 %v616, %v735
    %v737 = vpop.f32.mrb[0].mxu0
    %738 = vmatprep.mubr.bf16.mxu0 0
    %739 = vmatmul.mubr.bf16.gmra.mrb[0].mxu0 %v592
    %v740 = vpop.f32.mrb[0].mxu0
    %v741 = vadd.f32 %v616, %v740
    %v742 = vpop.f32.mrb[0].mxu0
    %v743 = vpop.f32.mrb[0].mxu0
    %v744 = vadd.f32 %v616, %v743
    %v745 = vpop.f32.mrb[0].mxu0
    %746 = vmatprep.mubr.bf16.mxu0 0
    %747 = vmatmul.mubr.bf16.gmra.mrb[0].mxu0 %v593
    %v748 = vpop.f32.mrb[0].mxu0
    %v749 = vadd.f32 %v616, %v748
    %v750 = vpop.f32.mrb[0].mxu0
    %v751 = vpop.f32.mrb[0].mxu0
    %v752 = vadd.f32 %v616, %v751
    %v753 = vpop.f32.mrb[0].mxu0
    %754 = vmatprep.mubr.bf16.mxu0 0
    %755 = vmatmul.mubr.bf16.gmra.mrb[0].mxu0 %v594
    %v756 = vpop.f32.mrb[0].mxu0
    %v757 = vadd.f32 %v616, %v756
    %v758 = vpop.f32.mrb[0].mxu0
    %v759 = vpop.f32.mrb[0].mxu0
    %v760 = vadd.f32 %v616, %v759
    %v761 = vpop.f32.mrb[0].mxu0
    %762 = vdwg.mxu0
    %v763 = vmax.f32 %v701, 0.0
    %v764 = vmax.f32 %v704, 0.0
    %v765 = vmax.f32 %v709, 0.0
    %v766 = vmax.f32 %v712, 0.0
    %v767 = vmax.f32 %v717, 0.0
    %v768 = vmax.f32 %v720, 0.0
    %v769 = vmax.f32 %v725, 0.0
    %v770 = vmax.f32 %v728, 0.0
    %v771 = vmax.f32 %v733, 0.0
    %v772 = vmax.f32 %v736, 0.0
    %v773 = vmax.f32 %v741, 0.0
    %v774 = vmax.f32 %v744, 0.0
    %v775 = vmax.f32 %v749, 0.0
    %v776 = vmax.f32 %v752, 0.0
    %v777 = vmax.f32 %v757, 0.0
    %v778 = vmax.f32 %v760, 0.0
    %v779 = vpack.c.bf16 %v764, %v763
    %v780 = vpack.c.bf16 %v766, %v765
    %v781 = vpack.c.bf16 %v768, %v767
    %v782 = vpack.c.bf16 %v770, %v769
    %v783 = vpack.c.bf16 %v772, %v771
    %v784 = vpack.c.bf16 %v774, %v773
    %v785 = vpack.c.bf16 %v776, %v775
    %v786 = vpack.c.bf16 %v778, %v777
    %v787 = vld [vmem:[%s7] sm:$0xf]
    %v788 = vld [vmem:[%s7 + $0x4] sm:$0xf]
    %v789 = vld [vmem:[%s7 + $0x8] sm:$0xf]
    %v790 = vld [vmem:[%s7 + $0xc] sm:$0xf]
    %v791 = vld [vmem:[%s7 + $0x10] sm:$0xf]
    %v792 = vld [vmem:[%s7 + $0x14] sm:$0xf]
    %v793 = vld [vmem:[%s7 + $0x18] sm:$0xf]
    %v794 = vld [vmem:[%s7 + $0x1c] sm:$0xf]
    %v795 = vld [vmem:[%s8] sm:$0x1]
    %v797 = vlaneseq
    %v798 = vshrl.u32 %v797, 7
    %v799 = vsub.s32 0, %v798
    %v800 = vrot.slane %v795, %v799
    %v810 = vunpack.c.l.b16 %v787
    %v811 = vunpack.c.l.b16 %v788
    %v812 = vunpack.c.l.b16 %v789
    %v813 = vunpack.c.l.b16 %v790
    %v814 = vunpack.c.l.b16 %v791
    %v815 = vunpack.c.l.b16 %v792
    %v816 = vunpack.c.l.b16 %v793
    %v817 = vunpack.c.l.b16 %v794
    %v818 = vpack.c.b16 %v811, %v810
    %v819 = vpack.c.b16 %v813, %v812
    %v820 = vpack.c.b16 %v815, %v814
    %v821 = vpack.c.b16 %v817, %v816
    %vm826 = vcmask 523264
    %v828 = vsel %vm826, %v779, 0
    %v831 = vsel %vm826, %v780, 0
    %v834 = vsel %vm826, %v781, 0
    %v837 = vsel %vm826, %v782, 0
    %v840 = vsel %vm826, %v783, 0
    %v843 = vsel %vm826, %v784, 0
    %v846 = vsel %vm826, %v785, 0
    %v849 = vsel %vm826, %v786, 0
    %851 = vmatprep.subr.bf16.mxu0 0
    %852 = vmatpush1.bf16.msra.mxu0 %v818
    %853 = vmatprep.subr.bf16.mxu0 0
    %854 = vmatpush1.bf16.msra.mxu0 %v819
    %855 = vmatprep.subr.bf16.mxu0 0
    %856 = vmatpush1.bf16.msra.mxu0 %v820
    %857 = vmatprep.subr.bf16.mxu0 0
    %858 = vmatpush1.bf16.msra.mxu0 %v821
    %859 = vmatprep.subr.bf16.mxu0 0
    %860 = vmatpush1.bf16.msra.mxu0 0
    %861 = vmatprep.subr.bf16.mxu0 0
    %862 = vmatpush1.bf16.msra.mxu0 0
    %863 = vmatprep.subr.bf16.mxu0 0
    %864 = vmatpush1.bf16.msra.mxu0 0
    %865 = vmatprep.subr.bf16.mxu0 0
    %866 = vmatpush1.bf16.msra.mxu0 0
    %867 = vmatprep.subr.bf16.mxu0 0
    %868 = vmatpush1.bf16.msra.mxu0 0
    %869 = vmatprep.subr.bf16.mxu0 0
    %870 = vmatpush1.bf16.msra.mxu0 0
    %871 = vmatprep.subr.bf16.mxu0 0
    %872 = vmatpush1.bf16.msra.mxu0 0
    %873 = vmatprep.subr.bf16.mxu0 0
    %874 = vmatpush1.bf16.msra.mxu0 0
    %875 = vmatprep.subr.bf16.mxu0 0
    %876 = vmatpush1.bf16.msra.mxu0 0
    %877 = vmatprep.subr.bf16.mxu0 0
    %878 = vmatpush1.bf16.msra.mxu0 0
    %879 = vmatprep.subr.bf16.mxu0 0
    %880 = vmatpush1.bf16.msra.mxu0 0
    %881 = vmatprep.subr.bf16.mxu0 0
    %882 = vmatpush1.bf16.msra.mxu0 0
    %883 = vmatprep.mubr.bf16.mxu0 0
    %884 = vmatmul.mubr.bf16.gmra.mrb[0].mxu0 %v828
    %v885 = vpop.f32.mrb[0].mxu0
    %v886 = vadd.f32 %v800, %v885
    %v887 = vpop.f32.mrb[0].mxu0
    %v888 = vpop.f32.mrb[0].mxu0
    %v889 = vadd.f32 %v800, %v888
    %v890 = vpop.f32.mrb[0].mxu0
    %891 = vmatprep.mubr.bf16.mxu0 0
    %892 = vmatmul.mubr.bf16.gmra.mrb[0].mxu0 %v831
    %v893 = vpop.f32.mrb[0].mxu0
    %v894 = vadd.f32 %v800, %v893
    %v895 = vpop.f32.mrb[0].mxu0
    %v896 = vpop.f32.mrb[0].mxu0
    %v897 = vadd.f32 %v800, %v896
    %v898 = vpop.f32.mrb[0].mxu0
    %899 = vmatprep.mubr.bf16.mxu0 0
    %900 = vmatmul.mubr.bf16.gmra.mrb[0].mxu0 %v834
    %v901 = vpop.f32.mrb[0].mxu0
    %v902 = vadd.f32 %v800, %v901
    %v903 = vpop.f32.mrb[0].mxu0
    %v904 = vpop.f32.mrb[0].mxu0
    %v905 = vadd.f32 %v800, %v904
    %v906 = vpop.f32.mrb[0].mxu0
    %907 = vmatprep.mubr.bf16.mxu0 0
    %908 = vmatmul.mubr.bf16.gmra.mrb[0].mxu0 %v837
    %v909 = vpop.f32.mrb[0].mxu0
    %v910 = vadd.f32 %v800, %v909
    %v911 = vpop.f32.mrb[0].mxu0
    %v912 = vpop.f32.mrb[0].mxu0
    %v913 = vadd.f32 %v800, %v912
    %v914 = vpop.f32.mrb[0].mxu0
    %915 = vmatprep.mubr.bf16.mxu0 0
    %916 = vmatmul.mubr.bf16.gmra.mrb[0].mxu0 %v840
    %v917 = vpop.f32.mrb[0].mxu0
    %v918 = vadd.f32 %v800, %v917
    %v919 = vpop.f32.mrb[0].mxu0
    %v920 = vpop.f32.mrb[0].mxu0
    %v921 = vadd.f32 %v800, %v920
    %v922 = vpop.f32.mrb[0].mxu0
    %923 = vmatprep.mubr.bf16.mxu0 0
    %924 = vmatmul.mubr.bf16.gmra.mrb[0].mxu0 %v843
    %v925 = vpop.f32.mrb[0].mxu0
    %v926 = vadd.f32 %v800, %v925
    %v927 = vpop.f32.mrb[0].mxu0
    %v928 = vpop.f32.mrb[0].mxu0
    %v929 = vadd.f32 %v800, %v928
    %v930 = vpop.f32.mrb[0].mxu0
    %931 = vmatprep.mubr.bf16.mxu0 0
    %932 = vmatmul.mubr.bf16.gmra.mrb[0].mxu0 %v846
    %v933 = vpop.f32.mrb[0].mxu0
    %v934 = vadd.f32 %v800, %v933
    %v935 = vpop.f32.mrb[0].mxu0
    %v936 = vpop.f32.mrb[0].mxu0
    %v937 = vadd.f32 %v800, %v936
    %v938 = vpop.f32.mrb[0].mxu0
    %939 = vmatprep.mubr.bf16.mxu0 0
    %940 = vmatmul.mubr.bf16.gmra.mrb[0].mxu0 %v849
    %v941 = vpop.f32.mrb[0].mxu0
    %v942 = vadd.f32 %v800, %v941
    %v943 = vpop.f32.mrb[0].mxu0
    %v944 = vpop.f32.mrb[0].mxu0
    %v945 = vadd.f32 %v800, %v944
    %v946 = vpop.f32.mrb[0].mxu0
    %947 = vdwg.mxu0
    %v948 = vtanh.pop %v886
    %v949 = vtanh.pop %v889
    %v950 = vtanh.pop %v894
    %v951 = vtanh.pop %v897
    %v952 = vtanh.pop %v902
    %v953 = vtanh.pop %v905
    %v954 = vtanh.pop %v910
    %v955 = vtanh.pop %v913
    %v956 = vtanh.pop %v918
    %v957 = vtanh.pop %v921
    %v958 = vtanh.pop %v926
    %v959 = vtanh.pop %v929
    %v960 = vtanh.pop %v934
    %v961 = vtanh.pop %v937
    %v962 = vtanh.pop %v942
    %v963 = vtanh.pop %v945
    %v964 = vxor.u32 %v886, 2147483648
    %v965 = vxor.u32 %v889, 2147483648
    %v966 = vxor.u32 %v894, 2147483648
    %v967 = vxor.u32 %v897, 2147483648
    %v968 = vxor.u32 %v902, 2147483648
    %v969 = vxor.u32 %v905, 2147483648
    %v970 = vxor.u32 %v910, 2147483648
    %v971 = vxor.u32 %v913, 2147483648
    %v972 = vxor.u32 %v918, 2147483648
    %v973 = vxor.u32 %v921, 2147483648
    %v974 = vxor.u32 %v926, 2147483648
    %v975 = vxor.u32 %v929, 2147483648
    %v976 = vxor.u32 %v934, 2147483648
    %v977 = vxor.u32 %v937, 2147483648
    %v978 = vxor.u32 %v942, 2147483648
    %v979 = vxor.u32 %v945, 2147483648
    %v980 = vmul.f32 %v964, 1.442695
    %v981 = vpow.pop %v980
    %v982 = vmul.f32 %v965, 1.442695
    %v983 = vpow.pop %v982
    %v984 = vmul.f32 %v966, 1.442695
    %v985 = vpow.pop %v984
    %v986 = vmul.f32 %v967, 1.442695
    %v987 = vpow.pop %v986
    %v988 = vmul.f32 %v968, 1.442695
    %v989 = vpow.pop %v988
    %v990 = vmul.f32 %v969, 1.442695
    %v991 = vpow.pop %v990
    %v992 = vmul.f32 %v970, 1.442695
    %v993 = vpow.pop %v992
    %v994 = vmul.f32 %v971, 1.442695
    %v995 = vpow.pop %v994
    %v996 = vmul.f32 %v972, 1.442695
    %v997 = vpow.pop %v996
    %v998 = vmul.f32 %v973, 1.442695
    %v999 = vpow.pop %v998
    %v1000 = vmul.f32 %v974, 1.442695
    %v1001 = vpow.pop %v1000
    %v1002 = vmul.f32 %v975, 1.442695
    %v1003 = vpow.pop %v1002
    %v1004 = vmul.f32 %v976, 1.442695
    %v1005 = vpow.pop %v1004
    %v1006 = vmul.f32 %v977, 1.442695
    %v1007 = vpow.pop %v1006
    %v1008 = vmul.f32 %v978, 1.442695
    %v1009 = vpow.pop %v1008
    %v1010 = vmul.f32 %v979, 1.442695
    %v1011 = vpow.pop %v1010
    %v1012 = vadd.f32 %v981, 1.0
    %v1013 = vadd.f32 %v983, 1.0
    %v1014 = vadd.f32 %v985, 1.0
    %v1015 = vadd.f32 %v987, 1.0
    %v1016 = vadd.f32 %v989, 1.0
    %v1017 = vadd.f32 %v991, 1.0
    %v1018 = vadd.f32 %v993, 1.0
    %v1019 = vadd.f32 %v995, 1.0
    %v1020 = vadd.f32 %v997, 1.0
    %v1021 = vadd.f32 %v999, 1.0
    %v1022 = vadd.f32 %v1001, 1.0
    %v1023 = vadd.f32 %v1003, 1.0
    %v1024 = vadd.f32 %v1005, 1.0
    %v1025 = vadd.f32 %v1007, 1.0
    %v1026 = vadd.f32 %v1009, 1.0
    %v1027 = vadd.f32 %v1011, 1.0
    %v1028 = vrcp.pop %v1012
    %v1029 = vmul.f32 1.0, %v1028
    %v1030 = vrcp.pop %v1013
    %v1031 = vmul.f32 1.0, %v1030
    %v1032 = vrcp.pop %v1014
    %v1033 = vmul.f32 1.0, %v1032
    %v1034 = vrcp.pop %v1015
    %v1035 = vmul.f32 1.0, %v1034
    %v1036 = vrcp.pop %v1016
    %v1037 = vmul.f32 1.0, %v1036
    %v1038 = vrcp.pop %v1017
    %v1039 = vmul.f32 1.0, %v1038
    %v1040 = vrcp.pop %v1018
    %v1041 = vmul.f32 1.0, %v1040
    %v1042 = vrcp.pop %v1019
    %v1043 = vmul.f32 1.0, %v1042
    %v1044 = vrcp.pop %v1020
    %v1045 = vmul.f32 1.0, %v1044
    %v1046 = vrcp.pop %v1021
    %v1047 = vmul.f32 1.0, %v1046
    %v1048 = vrcp.pop %v1022
    %v1049 = vmul.f32 1.0, %v1048
    %v1050 = vrcp.pop %v1023
    %v1051 = vmul.f32 1.0, %v1050
    %v1052 = vrcp.pop %v1024
    %v1053 = vmul.f32 1.0, %v1052
    %v1054 = vrcp.pop %v1025
    %v1055 = vmul.f32 1.0, %v1054
    %v1056 = vrcp.pop %v1026
    %v1057 = vmul.f32 1.0, %v1056
    %v1058 = vrcp.pop %v1027
    %v1059 = vmul.f32 1.0, %v1058
    %1076 = vrot.lane.b32.xlu0 %v1029, 64
    %v1077 = vpop.permute.xlu0 %1076
    %1078 = vrot.lane.b32.xlu0 %v1031, 64
    %v1079 = vpop.permute.xlu0 %1078
    %1080 = vrot.lane.b32.xlu0 %v1033, 64
    %v1081 = vpop.permute.xlu0 %1080
    %1082 = vrot.lane.b32.xlu0 %v1035, 64
    %v1083 = vpop.permute.xlu0 %1082
    %1084 = vrot.lane.b32.xlu0 %v1037, 64
    %v1085 = vpop.permute.xlu0 %1084
    %1086 = vrot.lane.b32.xlu0 %v1039, 64
    %v1087 = vpop.permute.xlu0 %1086
    %1088 = vrot.lane.b32.xlu0 %v1041, 64
    %v1089 = vpop.permute.xlu0 %1088
    %1090 = vrot.lane.b32.xlu0 %v1043, 64
    %v1091 = vpop.permute.xlu0 %1090
    %1092 = vrot.lane.b32.xlu0 %v1045, 64
    %v1093 = vpop.permute.xlu0 %1092
    %1094 = vrot.lane.b32.xlu0 %v1047, 64
    %v1095 = vpop.permute.xlu0 %1094
    %1096 = vrot.lane.b32.xlu0 %v1049, 64
    %v1097 = vpop.permute.xlu0 %1096
    %1098 = vrot.lane.b32.xlu0 %v1051, 64
    %v1099 = vpop.permute.xlu0 %1098
    %1100 = vrot.lane.b32.xlu0 %v1053, 64
    %v1101 = vpop.permute.xlu0 %1100
    %1102 = vrot.lane.b32.xlu0 %v1055, 64
    %v1103 = vpop.permute.xlu0 %1102
    %1104 = vrot.lane.b32.xlu0 %v1057, 64
    %v1105 = vpop.permute.xlu0 %1104
    %1106 = vrot.lane.b32.xlu0 %v1059, 64
    %v1107 = vpop.permute.xlu0 %1106
    %v1124 = vmul.f32 %v948, %v1077
    %v1125 = vmul.f32 %v949, %v1079
    %v1126 = vmul.f32 %v950, %v1081
    %v1127 = vmul.f32 %v951, %v1083
    %v1128 = vmul.f32 %v952, %v1085
    %v1129 = vmul.f32 %v953, %v1087
    %v1130 = vmul.f32 %v954, %v1089
    %v1131 = vmul.f32 %v955, %v1091
    %v1132 = vmul.f32 %v956, %v1093
    %v1133 = vmul.f32 %v957, %v1095
    %v1134 = vmul.f32 %v958, %v1097
    %v1135 = vmul.f32 %v959, %v1099
    %v1136 = vmul.f32 %v960, %v1101
    %v1137 = vmul.f32 %v961, %v1103
    %v1138 = vmul.f32 %v962, %v1105
    %v1139 = vmul.f32 %v963, %v1107
    %v1140 = vld [vmem:[%s9] sm:$0x1]
    %v1142 = vlaneseq
    %v1143 = vshrl.u32 %v1142, 7
    %v1144 = vsub.s32 0, %v1143
    %v1145 = vrot.slane %v1140, %v1144
    %v1147 = vmul.f32 %v1124, %v1145
    %v1148 = vmul.f32 %v1125, %v1145
    %v1149 = vmul.f32 %v1126, %v1145
    %v1150 = vmul.f32 %v1127, %v1145
    %v1151 = vmul.f32 %v1128, %v1145
    %v1152 = vmul.f32 %v1129, %v1145
    %v1153 = vmul.f32 %v1130, %v1145
    %v1154 = vmul.f32 %v1131, %v1145
    %v1155 = vmul.f32 %v1132, %v1145
    %v1156 = vmul.f32 %v1133, %v1145
    %v1157 = vmul.f32 %v1134, %v1145
    %v1158 = vmul.f32 %v1135, %v1145
    %v1159 = vmul.f32 %v1136, %v1145
    %v1160 = vmul.f32 %v1137, %v1145
    %v1161 = vmul.f32 %v1138, %v1145
    %v1162 = vmul.f32 %v1139, %v1145
    %v1163 = vsel %vm826, %v1147, 0.0
    %1164 = vadd.xlane.f32.xlu0 %v1163
    %v1165 = vpop.xlane.xlu0 %1164
    %v1166 = vsel %vm826, %v1148, 0.0
    %1167 = vadd.xlane.f32.xlu0 %v1166
    %v1168 = vpop.xlane.xlu0 %1167
    %v1169 = vsel %vm826, %v1149, 0.0
    %1170 = vadd.xlane.f32.xlu0 %v1169
    %v1171 = vpop.xlane.xlu0 %1170
    %v1172 = vsel %vm826, %v1150, 0.0
    %1173 = vadd.xlane.f32.xlu0 %v1172
    %v1174 = vpop.xlane.xlu0 %1173
    %v1175 = vsel %vm826, %v1151, 0.0
    %1176 = vadd.xlane.f32.xlu0 %v1175
    %v1177 = vpop.xlane.xlu0 %1176
    %v1178 = vsel %vm826, %v1152, 0.0
    %1179 = vadd.xlane.f32.xlu0 %v1178
    %v1180 = vpop.xlane.xlu0 %1179
    %v1181 = vsel %vm826, %v1153, 0.0
    %1182 = vadd.xlane.f32.xlu0 %v1181
    %v1183 = vpop.xlane.xlu0 %1182
    %v1184 = vsel %vm826, %v1154, 0.0
    %1185 = vadd.xlane.f32.xlu0 %v1184
    %v1186 = vpop.xlane.xlu0 %1185
    %v1187 = vsel %vm826, %v1155, 0.0
    %1188 = vadd.xlane.f32.xlu0 %v1187
    %v1189 = vpop.xlane.xlu0 %1188
    %v1190 = vsel %vm826, %v1156, 0.0
    %1191 = vadd.xlane.f32.xlu0 %v1190
    %v1192 = vpop.xlane.xlu0 %1191
    %v1193 = vsel %vm826, %v1157, 0.0
    %1194 = vadd.xlane.f32.xlu0 %v1193
    %v1195 = vpop.xlane.xlu0 %1194
    %v1196 = vsel %vm826, %v1158, 0.0
    %1197 = vadd.xlane.f32.xlu0 %v1196
    %v1198 = vpop.xlane.xlu0 %1197
    %v1199 = vsel %vm826, %v1159, 0.0
    %1200 = vadd.xlane.f32.xlu0 %v1199
    %v1201 = vpop.xlane.xlu0 %1200
    %v1202 = vsel %vm826, %v1160, 0.0
    %1203 = vadd.xlane.f32.xlu0 %v1202
    %v1204 = vpop.xlane.xlu0 %1203
    %v1205 = vsel %vm826, %v1161, 0.0
    %1206 = vadd.xlane.f32.xlu0 %v1205
    %v1207 = vpop.xlane.xlu0 %1206
    %v1208 = vsel %vm826, %v1162, 0.0
    %1209 = vadd.xlane.f32.xlu0 %v1208
    %v1210 = vpop.xlane.xlu0 %1209
    %v1211 = vld [vmem:[#allocation5] sm:$0x1]
    %v1213 = vlaneseq
    %v1214 = vshrl.u32 %v1213, 7
    %v1215 = vsub.s32 0, %v1214
    %v1216 = vrot.slane %v1211, %v1215
    %v1218 = vadd.f32 %v1165, %v1216
    %v1219 = vadd.f32 %v1168, %v1216
    %v1220 = vadd.f32 %v1171, %v1216
    %v1221 = vadd.f32 %v1174, %v1216
    %v1222 = vadd.f32 %v1177, %v1216
    %v1223 = vadd.f32 %v1180, %v1216
    %v1224 = vadd.f32 %v1183, %v1216
    %v1225 = vadd.f32 %v1186, %v1216
    %v1226 = vadd.f32 %v1189, %v1216
    %v1227 = vadd.f32 %v1192, %v1216
    %v1228 = vadd.f32 %v1195, %v1216
    %v1229 = vadd.f32 %v1198, %v1216
    %v1230 = vadd.f32 %v1201, %v1216
    %v1231 = vadd.f32 %v1204, %v1216
    %v1232 = vadd.f32 %v1207, %v1216
    %v1233 = vadd.f32 %v1210, %v1216
    %s1234 = smul.u32 0, 128
    %v1235 = vlaneseq
    %v1236 = vshrl.u32 %v1235, 7
    %v1237 = vadd.s32 %v1236, 8
    %v1238 = vadd.s32 %v1236, 16
    %v1239 = vadd.s32 %v1236, 24
    %v1240 = vadd.s32 %v1236, 32
    %v1241 = vadd.s32 %v1236, 40
    %v1242 = vadd.s32 %v1236, 48
    %v1243 = vadd.s32 %v1236, 56
    %v1244 = vadd.s32 %v1236, 64
    %v1245 = vadd.s32 %v1236, 72
    %v1246 = vadd.s32 %v1236, 80
    %v1247 = vadd.s32 %v1236, 88
    %v1248 = vadd.s32 %v1236, 96
    %v1249 = vadd.s32 %v1236, 104
    %v1250 = vadd.s32 %v1236, 112
    %v1251 = vadd.s32 %v1236, 120
    %v1252 = vstv %s1234
    %v1253 = vadd.s32 %v1252, %v1236
    %v1254 = vadd.s32 %v1252, %v1237
    %v1255 = vadd.s32 %v1252, %v1238
    %v1256 = vadd.s32 %v1252, %v1239
    %v1257 = vadd.s32 %v1252, %v1240
    %v1258 = vadd.s32 %v1252, %v1241
    %v1259 = vadd.s32 %v1252, %v1242
    %v1260 = vadd.s32 %v1252, %v1243
    %v1261 = vadd.s32 %v1252, %v1244
    %v1262 = vadd.s32 %v1252, %v1245
    %v1263 = vadd.s32 %v1252, %v1246
    %v1264 = vadd.s32 %v1252, %v1247
    %v1265 = vadd.s32 %v1252, %v1248
    %v1266 = vadd.s32 %v1252, %v1249
    %v1267 = vadd.s32 %v1252, %v1250
    %v1268 = vadd.s32 %v1252, %v1251
    %vm1269 = vcmp.lt.s32.totalorder %v1253, 8
    %vm1270 = vcmp.lt.s32.totalorder %v1254, 8
    %vm1271 = vcmp.lt.s32.totalorder %v1255, 8
    %vm1272 = vcmp.lt.s32.totalorder %v1256, 8
    %vm1273 = vcmp.lt.s32.totalorder %v1257, 8
    %vm1274 = vcmp.lt.s32.totalorder %v1258, 8
    %vm1275 = vcmp.lt.s32.totalorder %v1259, 8
    %vm1276 = vcmp.lt.s32.totalorder %v1260, 8
    %vm1277 = vcmp.lt.s32.totalorder %v1261, 8
    %vm1278 = vcmp.lt.s32.totalorder %v1262, 8
    %vm1279 = vcmp.lt.s32.totalorder %v1263, 8
    %vm1280 = vcmp.lt.s32.totalorder %v1264, 8
    %vm1281 = vcmp.lt.s32.totalorder %v1265, 8
    %vm1282 = vcmp.lt.s32.totalorder %v1266, 8
    %vm1283 = vcmp.lt.s32.totalorder %v1267, 8
    %vm1284 = vcmp.lt.s32.totalorder %v1268, 8
    %v1285 = vsel %vm1269, %v1218, -1e+30
    %v1286 = vsel %vm1270, %v1219, -1e+30
    %v1287 = vsel %vm1271, %v1220, -1e+30
    %v1288 = vsel %vm1272, %v1221, -1e+30
    %v1289 = vsel %vm1273, %v1222, -1e+30
    %v1290 = vsel %vm1274, %v1223, -1e+30
    %v1291 = vsel %vm1275, %v1224, -1e+30
    %v1292 = vsel %vm1276, %v1225, -1e+30
    %v1293 = vsel %vm1277, %v1226, -1e+30
    %v1294 = vsel %vm1278, %v1227, -1e+30
    %v1295 = vsel %vm1279, %v1228, -1e+30
    %v1296 = vsel %vm1280, %v1229, -1e+30
    %v1297 = vsel %vm1281, %v1230, -1e+30
    %v1298 = vsel %vm1282, %v1231, -1e+30
    %v1299 = vsel %vm1283, %v1232, -1e+30
    %v1300 = vsel %vm1284, %v1233, -1e+30
    %1301 = vxpose.xlu0.b32.start [1/16] %v1285, 128
    %1302 = vxpose.xlu0.b32.cont [2/16] %v1286, 128
    %1303 = vxpose.xlu0.b32.cont [3/16] %v1287, 128
    %1304 = vxpose.xlu0.b32.cont [4/16] %v1288, 128
    %1305 = vxpose.xlu0.b32.cont [5/16] %v1289, 128
    %1306 = vxpose.xlu0.b32.cont [6/16] %v1290, 128
    %1307 = vxpose.xlu0.b32.cont [7/16] %v1291, 128
    %1308 = vxpose.xlu0.b32.cont [8/16] %v1292, 128
    %1309 = vxpose.xlu0.b32.cont [9/16] %v1293, 128
    %1310 = vxpose.xlu0.b32.cont [10/16] %v1294, 128
    %1311 = vxpose.xlu0.b32.cont [11/16] %v1295, 128
    %1312 = vxpose.xlu0.b32.cont [12/16] %v1296, 128
    %1313 = vxpose.xlu0.b32.cont [13/16] %v1297, 128
    %1314 = vxpose.xlu0.b32.cont [14/16] %v1298, 128
    %1315 = vxpose.xlu0.b32.cont [15/16] %v1299, 128
    %1316 = vxpose.xlu0.b32.end [16/16] %v1300, 128
    %v1317 = vpop.trf.xlu0
    %v1318 = vpop.trf.xlu0
    %v1319 = vpop.trf.xlu0
    %v1320 = vpop.trf.xlu0
    %v1321 = vpop.trf.xlu0
    %v1322 = vpop.trf.xlu0
    %v1323 = vpop.trf.xlu0
    %v1324 = vpop.trf.xlu0
    %v1325 = vpop.trf.xlu0
    %v1326 = vpop.trf.xlu0
    %v1327 = vpop.trf.xlu0
    %v1328 = vpop.trf.xlu0
    %v1329 = vpop.trf.xlu0
    %v1330 = vpop.trf.xlu0
    %v1331 = vpop.trf.xlu0
    %v1332 = vpop.trf.xlu0
    %1333 = vst [vmem:[#allocation8] sm:$0x1] %v1317
    %v1334 = vld [vmem:[#allocation2] sm:$0x1]
    %vm1335 = vcmask 7168
    %v1336 = vsel %vm1335, %v1285, -inf
    %v1337 = vsel %vm1335, %v1286, -inf
    %v1338 = vsel %vm1335, %v1287, -inf
    %v1339 = vsel %vm1335, %v1288, -inf
    %v1340 = vsel %vm1335, %v1289, -inf
    %v1341 = vmax.f32 %v1336, %v1340
    %v1342 = vsel %vm1335, %v1290, -inf
    %v1343 = vmax.f32 %v1337, %v1342
    %v1344 = vsel %vm1335, %v1291, -inf
    %v1345 = vmax.f32 %v1338, %v1344
    %v1346 = vsel %vm1335, %v1292, -inf
    %v1347 = vmax.f32 %v1339, %v1346
    %v1348 = vsel %vm1335, %v1293, -inf
    %v1349 = vmax.f32 %v1341, %v1348
    %v1350 = vsel %vm1335, %v1294, -inf
    %v1351 = vmax.f32 %v1343, %v1350
    %v1352 = vsel %vm1335, %v1295, -inf
    %v1353 = vmax.f32 %v1345, %v1352
    %v1354 = vsel %vm1335, %v1296, -inf
    %v1355 = vmax.f32 %v1347, %v1354
    %v1356 = vsel %vm1335, %v1297, -inf
    %v1357 = vmax.f32 %v1349, %v1356
    %v1358 = vsel %vm1335, %v1298, -inf
    %v1359 = vmax.f32 %v1351, %v1358
    %v1360 = vsel %vm1335, %v1299, -inf
    %v1361 = vmax.f32 %v1353, %v1360
    %v1362 = vsel %vm1335, %v1300, -inf
    %v1363 = vmax.f32 %v1355, %v1362
    %v1364 = vmax.f32 %v1357, %v1359
    %v1365 = vmax.f32 %v1361, %v1363
    %v1366 = vmax.f32 %v1364, %v1365
    %v1367 = vrot.slane %v1366, 4
    %v1368 = vmax.f32 %v1366, %v1367
    %v1369 = vrot.slane %v1368, 2
    %v1370 = vmax.f32 %v1368, %v1369
    %v1371 = vrot.slane %v1370, 1
    %v1372 = vmax.f32 %v1370, %v1371
    %v1373 = vmax.f32 %v1334, %v1372
    %v1374 = vsub.f32 %v1334, %v1373
    %v1375 = vmul.f32 %v1374, 1.442695
    %v1376 = vpow.pop %v1375
    %v1378 = vlaneseq
    %v1379 = vshrl.u32 %v1378, 7
    %v1380 = vsub.s32 0, %v1379
    %v1381 = vrot.slane %v1373, %v1380
    %v1383 = vsub.f32 %v1285, %v1381
    %v1384 = vsub.f32 %v1286, %v1381
    %v1385 = vsub.f32 %v1287, %v1381
    %v1386 = vsub.f32 %v1288, %v1381
    %v1387 = vsub.f32 %v1289, %v1381
    %v1388 = vsub.f32 %v1290, %v1381
    %v1389 = vsub.f32 %v1291, %v1381
    %v1390 = vsub.f32 %v1292, %v1381
    %v1391 = vsub.f32 %v1293, %v1381
    %v1392 = vsub.f32 %v1294, %v1381
    %v1393 = vsub.f32 %v1295, %v1381
    %v1394 = vsub.f32 %v1296, %v1381
    %v1395 = vsub.f32 %v1297, %v1381
    %v1396 = vsub.f32 %v1298, %v1381
    %v1397 = vsub.f32 %v1299, %v1381
    %v1398 = vsub.f32 %v1300, %v1381
    %v1399 = vmul.f32 %v1383, 1.442695
    %v1400 = vpow.pop %v1399
    %v1401 = vmul.f32 %v1384, 1.442695
    %v1402 = vpow.pop %v1401
    %v1403 = vmul.f32 %v1385, 1.442695
    %v1404 = vpow.pop %v1403
    %v1405 = vmul.f32 %v1386, 1.442695
    %v1406 = vpow.pop %v1405
    %v1407 = vmul.f32 %v1387, 1.442695
    %v1408 = vpow.pop %v1407
    %v1409 = vmul.f32 %v1388, 1.442695
    %v1410 = vpow.pop %v1409
    %v1411 = vmul.f32 %v1389, 1.442695
    %v1412 = vpow.pop %v1411
    %v1413 = vmul.f32 %v1390, 1.442695
    %v1414 = vpow.pop %v1413
    %v1415 = vmul.f32 %v1391, 1.442695
    %v1416 = vpow.pop %v1415
    %v1417 = vmul.f32 %v1392, 1.442695
    %v1418 = vpow.pop %v1417
    %v1419 = vmul.f32 %v1393, 1.442695
    %v1420 = vpow.pop %v1419
    %v1421 = vmul.f32 %v1394, 1.442695
    %v1422 = vpow.pop %v1421
    %v1423 = vmul.f32 %v1395, 1.442695
    %v1424 = vpow.pop %v1423
    %v1425 = vmul.f32 %v1396, 1.442695
    %v1426 = vpow.pop %v1425
    %v1427 = vmul.f32 %v1397, 1.442695
    %v1428 = vpow.pop %v1427
    %v1429 = vmul.f32 %v1398, 1.442695
    %v1430 = vpow.pop %v1429
    %v1431 = vld [vmem:[#allocation3] sm:$0x1]
    %v1432 = vmul.f32 %v1376, %v1431
    %v1433 = vsel %vm1335, %v1400, 0.0
    %v1434 = vsel %vm1335, %v1402, 0.0
    %v1435 = vadd.f32 %v1433, %v1434
    %v1436 = vsel %vm1335, %v1404, 0.0
    %v1437 = vadd.f32 %v1435, %v1436
    %v1438 = vsel %vm1335, %v1406, 0.0
    %v1439 = vadd.f32 %v1437, %v1438
    %v1440 = vsel %vm1335, %v1408, 0.0
    %v1441 = vadd.f32 %v1439, %v1440
    %v1442 = vsel %vm1335, %v1410, 0.0
    %v1443 = vadd.f32 %v1441, %v1442
    %v1444 = vsel %vm1335, %v1412, 0.0
    %v1445 = vadd.f32 %v1443, %v1444
    %v1446 = vsel %vm1335, %v1414, 0.0
    %v1447 = vadd.f32 %v1445, %v1446
    %v1448 = vsel %vm1335, %v1416, 0.0
    %v1449 = vadd.f32 %v1447, %v1448
    %v1450 = vsel %vm1335, %v1418, 0.0
    %v1451 = vadd.f32 %v1449, %v1450
    %v1452 = vsel %vm1335, %v1420, 0.0
    %v1453 = vadd.f32 %v1451, %v1452
    %v1454 = vsel %vm1335, %v1422, 0.0
    %v1455 = vadd.f32 %v1453, %v1454
    %v1456 = vsel %vm1335, %v1424, 0.0
    %v1457 = vadd.f32 %v1455, %v1456
    %v1458 = vsel %vm1335, %v1426, 0.0
    %v1459 = vadd.f32 %v1457, %v1458
    %v1460 = vsel %vm1335, %v1428, 0.0
    %v1461 = vadd.f32 %v1459, %v1460
    %v1462 = vsel %vm1335, %v1430, 0.0
    %v1463 = vadd.f32 %v1461, %v1462
    %v1464 = vrot.slane %v1463, 4
    %v1465 = vadd.f32 %v1463, %v1464
    %v1466 = vrot.slane %v1465, 2
    %v1467 = vadd.f32 %v1465, %v1466
    %v1468 = vrot.slane %v1467, 1
    %v1469 = vadd.f32 %v1467, %v1468
    %v1470 = vadd.f32 %v1432, %v1469
    %vm1471 = vcmask 0
    %1472 = vst.msk [vmem:[#allocation3] sm:$0x1] %vm1471, %v1470
    %v1473 = vld [vmem:[#allocation4] sm:$0x1]
    %1475 = vset.pattern.permute.xlu0 0
    %1476 = vperm.xlu0 %1475, %v1376
    %v1477 = vpop.permute.xlu0 %1476
    %v1479 = vlaneseq
    %v1480 = vshrl.u32 %v1479, 7
    %v1481 = vsub.s32 0, %v1480
    %v1482 = vrot.slane %v1477, %v1481
    %v1483 = vmul.f32 %v1482, %v1473
    %1485 = vset.pattern.permute.xlu0 0
    %1486 = vperm.xlu0 %1485, %v1400
    %v1487 = vpop.permute.xlu0 %1486
    %1490 = vset.pattern.permute.xlu0 0
    %1491 = vperm.xlu0 %1490, %v1402
    %v1492 = vpop.permute.xlu0 %1491
    %1495 = vset.pattern.permute.xlu0 0
    %1496 = vperm.xlu0 %1495, %v1404
    %v1497 = vpop.permute.xlu0 %1496
    %1500 = vset.pattern.permute.xlu0 0
    %1501 = vperm.xlu0 %1500, %v1406
    %v1502 = vpop.permute.xlu0 %1501
    %1505 = vset.pattern.permute.xlu0 0
    %1506 = vperm.xlu0 %1505, %v1408
    %v1507 = vpop.permute.xlu0 %1506
    %1510 = vset.pattern.permute.xlu0 0
    %1511 = vperm.xlu0 %1510, %v1410
    %v1512 = vpop.permute.xlu0 %1511
    %1515 = vset.pattern.permute.xlu0 0
    %1516 = vperm.xlu0 %1515, %v1412
    %v1517 = vpop.permute.xlu0 %1516
    %1520 = vset.pattern.permute.xlu0 0
    %1521 = vperm.xlu0 %1520, %v1414
    %v1522 = vpop.permute.xlu0 %1521
    %1525 = vset.pattern.permute.xlu0 0
    %1526 = vperm.xlu0 %1525, %v1416
    %v1527 = vpop.permute.xlu0 %1526
    %1530 = vset.pattern.permute.xlu0 0
    %1531 = vperm.xlu0 %1530, %v1418
    %v1532 = vpop.permute.xlu0 %1531
    %1535 = vset.pattern.permute.xlu0 0
    %1536 = vperm.xlu0 %1535, %v1420
    %v1537 = vpop.permute.xlu0 %1536
    %1540 = vset.pattern.permute.xlu0 0
    %1541 = vperm.xlu0 %1540, %v1422
    %v1542 = vpop.permute.xlu0 %1541
    %1545 = vset.pattern.permute.xlu0 0
    %1546 = vperm.xlu0 %1545, %v1424
    %v1547 = vpop.permute.xlu0 %1546
    %1550 = vset.pattern.permute.xlu0 0
    %1551 = vperm.xlu0 %1550, %v1426
    %v1552 = vpop.permute.xlu0 %1551
    %1555 = vset.pattern.permute.xlu0 0
    %1556 = vperm.xlu0 %1555, %v1428
    %v1557 = vpop.permute.xlu0 %1556
    %1560 = vset.pattern.permute.xlu0 0
    %1561 = vperm.xlu0 %1560, %v1430
    %v1562 = vpop.permute.xlu0 %1561
    %v1564 = vmul.f32 %v1487, %v763
    %v1565 = vmul.f32 %v1492, %v764
    %v1566 = vmul.f32 %v1497, %v765
    %v1567 = vmul.f32 %v1502, %v766
    %v1568 = vmul.f32 %v1507, %v767
    %v1569 = vmul.f32 %v1512, %v768
    %v1570 = vmul.f32 %v1517, %v769
    %v1571 = vmul.f32 %v1522, %v770
    %v1572 = vmul.f32 %v1527, %v771
    %v1573 = vmul.f32 %v1532, %v772
    %v1574 = vmul.f32 %v1537, %v773
    %v1575 = vmul.f32 %v1542, %v774
    %v1576 = vmul.f32 %v1547, %v775
    %v1577 = vmul.f32 %v1552, %v776
    %v1578 = vmul.f32 %v1557, %v777
    %v1579 = vmul.f32 %v1562, %v778
    %v1580 = vsel %vm826, %v1564, 0.0
    %v1581 = vsel %vm826, %v1565, 0.0
    %v1582 = vadd.f32 %v1580, %v1581
    %v1583 = vsel %vm826, %v1566, 0.0
    %v1584 = vadd.f32 %v1582, %v1583
    %v1585 = vsel %vm826, %v1567, 0.0
    %v1586 = vadd.f32 %v1584, %v1585
    %v1587 = vsel %vm826, %v1568, 0.0
    %v1588 = vadd.f32 %v1586, %v1587
    %v1589 = vsel %vm826, %v1569, 0.0
    %v1590 = vadd.f32 %v1588, %v1589
    %v1591 = vsel %vm826, %v1570, 0.0
    %v1592 = vadd.f32 %v1590, %v1591
    %v1593 = vsel %vm826, %v1571, 0.0
    %v1594 = vadd.f32 %v1592, %v1593
    %v1595 = vsel %vm826, %v1572, 0.0
    %v1596 = vadd.f32 %v1594, %v1595
    %v1597 = vsel %vm826, %v1573, 0.0
    %v1598 = vadd.f32 %v1596, %v1597
    %v1599 = vsel %vm826, %v1574, 0.0
    %v1600 = vadd.f32 %v1598, %v1599
    %v1601 = vsel %vm826, %v1575, 0.0
    %v1602 = vadd.f32 %v1600, %v1601
    %v1603 = vsel %vm826, %v1576, 0.0
    %v1604 = vadd.f32 %v1602, %v1603
    %v1605 = vsel %vm826, %v1577, 0.0
    %v1606 = vadd.f32 %v1604, %v1605
    %v1607 = vsel %vm826, %v1578, 0.0
    %v1608 = vadd.f32 %v1606, %v1607
    %v1609 = vsel %vm826, %v1579, 0.0
    %v1610 = vadd.f32 %v1608, %v1609
    %v1611 = vrot.slane %v1610, 4
    %v1612 = vadd.f32 %v1610, %v1611
    %v1613 = vrot.slane %v1612, 2
    %v1614 = vadd.f32 %v1612, %v1613
    %v1615 = vrot.slane %v1614, 1
    %v1616 = vadd.f32 %v1614, %v1615
    %v1617 = vadd.f32 %v1483, %v1616
    %vm1618 = vcmask 516096
    %1619 = vst.msk [vmem:[#allocation4] sm:$0x1] %vm1618, %v1617
    %1620 = vst.msk [vmem:[#allocation2] sm:$0x1] %vm1471, %v1373
    // Predicated region
    $region58: #{tpu_custom_call.1} parent=1 // pred_check
      %p1621 = pneg %p52
    $region59: #{tpu_custom_call.1} parent=1 // pred_check_branch
      %1623 = sbr.rel (%p1621) target = $region61
    $region60: #{tpu_custom_call.1} parent=1 // pred_region
      %v1624 = vld [vmem:[#allocation3] sm:$0x1]
      %v1625 = vld [vmem:[#allocation4] sm:$0x1]
      %1627 = vset.pattern.permute.xlu0 0
      %1628 = vperm.xlu0 %1627, %v1624
      %v1629 = vpop.permute.xlu0 %1628
      %v1631 = vlaneseq
      %v1632 = vshrl.u32 %v1631, 7
      %v1633 = vsub.s32 0, %v1632
      %v1634 = vrot.slane %v1629, %v1633
      %v1635 = vrcp.pop %v1634
      %v1636 = vmul.f32 %v1625, %v1635
      %v1637 = vld [vmem:[%s11] sm:$0xff]
      %v1638 = vld [vmem:[%s11 + $0x8] sm:$0xff]
      %v1639 = vld [vmem:[%s11 + $0x10] sm:$0xff]
      %v1640 = vld [vmem:[%s11 + $0x18] sm:$0xff]
      %v1641 = vld [vmem:[%s11 + $0x20] sm:$0xff]
      %v1642 = vld [vmem:[%s11 + $0x28] sm:$0xff]
      %v1643 = vld [vmem:[%s11 + $0x30] sm:$0xff]
      %v1644 = vld [vmem:[%s11 + $0x38] sm:$0xff]
      %v1645 = vld [vmem:[%s12] sm:$0x1]
      %v1647 = vsel %vm826, %v1636, 0
      %1649 = vmatprep.subr.mxu0 0.0
      %1650 = vmatpush1.msra.mxu0 %v1637
      %1651 = vmatprep.subr.mxu0 0.0
      %1652 = vmatpush1.msra.mxu0 %v1638
      %1653 = vmatprep.subr.mxu0 0.0
      %1654 = vmatpush1.msra.mxu0 %v1639
      %1655 = vmatprep.subr.mxu0 0.0
      %1656 = vmatpush1.msra.mxu0 %v1640
      %1657 = vmatprep.subr.mxu0 0.0
      %1658 = vmatpush1.msra.mxu0 %v1641
      %1659 = vmatprep.subr.mxu0 0.0
      %1660 = vmatpush1.msra.mxu0 %v1642
      %1661 = vmatprep.subr.mxu0 0.0
      %1662 = vmatpush1.msra.mxu0 %v1643
      %1663 = vmatprep.subr.mxu0 0.0
      %1664 = vmatpush1.msra.mxu0 %v1644
      %1665 = vmatprep.subr.mxu0 0.0
      %1666 = vmatpush1.msra.mxu0 0.0
      %1667 = vmatprep.subr.mxu0 0.0
      %1668 = vmatpush1.msra.mxu0 0.0
      %1669 = vmatprep.subr.mxu0 0.0
      %1670 = vmatpush1.msra.mxu0 0.0
      %1671 = vmatprep.subr.mxu0 0.0
      %1672 = vmatpush1.msra.mxu0 0.0
      %1673 = vmatprep.subr.mxu0 0.0
      %1674 = vmatpush1.msra.mxu0 0.0
      %1675 = vmatprep.subr.mxu0 0.0
      %1676 = vmatpush1.msra.mxu0 0.0
      %1677 = vmatprep.subr.mxu0 0.0
      %1678 = vmatpush1.msra.mxu0 0.0
      %1679 = vmatprep.subr.mxu0 0.0
      %1680 = vmatpush1.msra.mxu0 0.0
      %1681 = vmatprep.subr.mxu0 0.0
      %1682 = vmatpush1.msra.mxu0 0.0
      %1683 = vmatprep.subr.mxu0 0.0
      %1684 = vmatpush1.msra.mxu0 0.0
      %1685 = vmatprep.subr.mxu0 0.0
      %1686 = vmatpush1.msra.mxu0 0.0
      %1687 = vmatprep.subr.mxu0 0.0
      %1688 = vmatpush1.msra.mxu0 0.0
      %1689 = vmatprep.subr.mxu0 0.0
      %1690 = vmatpush1.msra.mxu0 0.0
      %1691 = vmatprep.subr.mxu0 0.0
      %1692 = vmatpush1.msra.mxu0 0.0
      %1693 = vmatprep.subr.mxu0 0.0
      %1694 = vmatpush1.msra.mxu0 0.0
      %1695 = vmatprep.subr.mxu0 0.0
      %1696 = vmatpush1.msra.mxu0 0.0
      %1697 = vmatprep.subr.mxu0 0.0
      %1698 = vmatpush1.msra.mxu0 0.0
      %1699 = vmatprep.subr.mxu0 0.0
      %1700 = vmatpush1.msra.mxu0 0.0
      %1701 = vmatprep.subr.mxu0 0.0
      %1702 = vmatpush1.msra.mxu0 0.0
      %1703 = vmatprep.subr.mxu0 0.0
      %1704 = vmatpush1.msra.mxu0 0.0
      %1705 = vmatprep.subr.mxu0 0.0
      %1706 = vmatpush1.msra.mxu0 0.0
      %1707 = vmatprep.subr.mxu0 0.0
      %1708 = vmatpush1.msra.mxu0 0.0
      %1709 = vmatprep.subr.mxu0 0.0
      %1710 = vmatpush1.msra.mxu0 0.0
      %1711 = vmatprep.subr.mxu0 0.0
      %1712 = vmatpush1.msra.mxu0 0.0
      %1713 = vmatprep.mubr.f32.mxu0 0.0
      %1714 = vmatmul.mubr.f32.gmra.mrb[0].mxu0 %v1647
      %v1715 = vpop.f32.mrb[0].mxu0
      %v1716 = vadd.f32 %v1645, %v1715
      %v1717 = vpop.f32.mrb[0].mxu0
      %1718 = vdwg.mxu0
      %vm1719 = vcmask 8192
      %1720 = vst.msk [vmem:[#allocation6] sm:$0x1] %vm1719, %v1716
      %v1721 = vld [vmem:[#allocation2] sm:$0x1]
      %v1722 = vlog2.pop %v1624
      %v1723 = vmul.f32 %v1722, 0.6931472
      %v1724 = vadd.f32 %v1721, %v1723
      %1725 = vst.msk [vmem:[#allocation10] sm:$0x1] %vm1471, %v1724
    $region61: #{tpu_custom_call.1} parent=1 // pred_fallthru
      _
    // Predicated region
    $region62: #{tpu_custom_call.1} parent=1 // pred_check
      _
    $region63: #{tpu_custom_call.1} parent=1 // pred_check_branch
      %1727 = sbr.rel (0) target = $region65
    $region64: #{tpu_custom_call.1} parent=1 // pred_region
      %s1729 = ssub.s32 16, 16
      %1730 = vsyncadd [#allocation7], %s1729
      %s1732 = sshll.u32 [#allocation6], 4
      %s1733 = int_to_ptr.vmem [resolvable:$true] %s1732
      %1735 = dma.vmem_to_hbm [thread:$0]  %s1733, 16, %s13, [#allocation7]
    $region65: #{tpu_custom_call.1} parent=1 // pred_fallthru
      _
    // Predicated region
    $region66: #{tpu_custom_call.1} parent=1 // pred_check
      _
    $region67: #{tpu_custom_call.1} parent=1 // pred_check_branch
      %1737 = sbr.rel (0) target = $region69
    $region68: #{tpu_custom_call.1} parent=1 // pred_region
      %s1739 = ssub.s32 16, 16
      %1740 = vsyncadd [#allocation9], %s1739
      %s1742 = sshll.u32 [#allocation8], 4
      %s1743 = int_to_ptr.vmem [resolvable:$true] %s1742
      %1745 = dma.vmem_to_hbm [thread:$0]  %s1743, 16, %s14, [#allocation9]
    $region69: #{tpu_custom_call.1} parent=1 // pred_fallthru
      _
    // Predicated region
    $region70: #{tpu_custom_call.1} parent=1 // pred_check
      _
    $region71: #{tpu_custom_call.1} parent=1 // pred_check_branch
      %1747 = sbr.rel (0) target = $region73
    $region72: #{tpu_custom_call.1} parent=1 // pred_region
      %s1749 = ssub.s32 16, 16
      %1750 = vsyncadd [#allocation9], %s1749
      %s1752 = sshll.u32 [#allocation10], 4
      %s1753 = int_to_ptr.vmem [resolvable:$true] %s1752
      %1755 = dma.vmem_to_hbm [thread:$0]  %s1753, 16, %s15, [#allocation9]
    $region73: #{tpu_custom_call.1} parent=1 // pred_fallthru
      _
    // Predicated region
    $region74: #{tpu_custom_call.1} parent=1 // pred_check
      _
    $region75: #{tpu_custom_call.1} parent=1 // pred_check_branch
      %1757 = sbr.rel (0) target = $region77
    $region76: #{tpu_custom_call.1} parent=1 // pred_region
      %1758 = dma.done [#allocation7], 16
    $region77: #{tpu_custom_call.1} parent=1 // pred_fallthru
      _
    // Predicated region
    $region78: #{tpu_custom_call.1} parent=1 // pred_check
      _
    $region79: #{tpu_custom_call.1} parent=1 // pred_check_branch
      %1760 = sbr.rel (0) target = $region81
    $region80: #{tpu_custom_call.1} parent=1 // pred_region
      %1761 = dma.done [#allocation9], 16
    $region81: #{tpu_custom_call.1} parent=1 // pred_fallthru
      _
    // Predicated region
    $region82: #{tpu_custom_call.1} parent=1 // pred_check
      _
    $region83: #{tpu_custom_call.1} parent=1 // pred_check_branch
      %1763 = sbr.rel (0) target = $region85
    $region84: #{tpu_custom_call.1} parent=1 // pred_region
      %1764 = dma.done [#allocation9], 16
    $region85: #{tpu_custom_call.1} parent=1 // pred_fallthru
      _
    %1765 = vsyncpa [#allocation7], 1
    %1766 = vsyncpa [#allocation9], 1

</llo_original>
